<compile_context>
chip_gen: v7x
topology: tpu7x:2x2x1
jax: 0.10.0
libtpu: 0.0.40
codegen_flags: <defaults>
</compile_context>

<pallas_src>
import jax
import jax.numpy as jnp
from jax.experimental import pallas as pl
from jax.experimental.pallas import tpu as pltpu


def _round_up(x, m):
    return ((x + m - 1) // m) * m


def _leaky(x):
    # LeakyReLU(0.2) as mul+max (2 VALU ops) instead of mul+cmp+select (3).
    return jnp.maximum(x, 0.2 * x)


# --------------------------- stage 1: BN statistics --------------------------
def _stats_kernel(x_ref, w1t_ref, b1_ref, w2t_ref, sum_ref, sq_ref):
    # x_ref: (Cin, tile_s)   w1t_ref: (ndf, Cin)   b1_ref: (ndf, 1)
    # w2t_ref: (c2, ndf)     sum_ref/sq_ref: (c2, 1) per-(core, n) accumulators.
    @pl.when(pl.program_id(2) == 0)
    def _():
        sum_ref[...] = jnp.zeros_like(sum_ref)
        sq_ref[...] = jnp.zeros_like(sq_ref)

    x = x_ref[...].astype(jnp.bfloat16)
    w1t = w1t_ref[...].astype(jnp.bfloat16)
    w2t = w2t_ref[...].astype(jnp.bfloat16)

    h1 = jnp.dot(w1t, x, preferred_element_type=jnp.float32) + b1_ref[...]
    h1 = _leaky(h1).astype(jnp.bfloat16)
    h2 = jnp.dot(w2t, h1, preferred_element_type=jnp.float32)  # (c2, tile_s)

    sum_ref[...] += jnp.sum(h2, axis=1, keepdims=True)
    sq_ref[...] += jnp.sum(h2 * h2, axis=1, keepdims=True)


# ----------------- stage 2: recompute + BN(shift) + LeakyReLU + proj ---------
def _out_kernel(x_ref, w1t_ref, b1_ref, w2ts_ref, shift_ref, w3c_ref, out_ref):
    # x_ref: (Cin, tile_s); w2ts_ref already has BN scale folded in;
    # shift/w3c: (c2, 1); out_ref: (1, tile_s) lane-dense.
    x = x_ref[...].astype(jnp.bfloat16)
    w1t = w1t_ref[...].astype(jnp.bfloat16)
    w2ts = w2ts_ref[...].astype(jnp.bfloat16)

    h1 = jnp.dot(w1t, x, preferred_element_type=jnp.float32) + b1_ref[...]
    h1 = _leaky(h1).astype(jnp.bfloat16)
    h2 = jnp.dot(w2ts, h1, preferred_element_type=jnp.float32)  # scale folded
    y = _leaky(h2 + shift_ref[...])
    # width-1 projection on VPU/XLU (multiply + sublane reduce), lane-dense store
    out_ref[...] = jnp.sum(y * w3c_ref[...], axis=0, keepdims=True)


# --------------------------------- wrapper -----------------------------------
def pixel_discriminator(x_ncdhw, params, *, tile_s=4096, eps=1e-5):
    """x_ncdhw: (N, Cin, D, H, W) float32. Returns (N, 1, D, H, W) float32."""
    w1, b1, w2, gamma, beta, w3 = params
    N, Cin, D, H, W = x_ncdhw.shape
    ndf = w1.shape[1]
    c2 = w2.shape[1]
    S = D * H * W
    P = N * S

    # Channels-first view (contiguous reshape, no transpose / HBM round trip).
    x = x_ncdhw.reshape(N, Cin, S)

    # Large lane-dense tiles; pad spatial axis if it is not a multiple of tile.
    tile_s = min(tile_s, _round_up(S, 128))
    tile_s = _round_up(tile_s, 128)
    num_tiles = pl.cdiv(S, tile_s)

    # v7x: stage 1's only parallel axis is the batch; when N == 1 split the
    # spatial tiles over a leading parallel axis so both TensorCores are busy.
    split = 2 if (N == 1 and num_tiles >= 2) else 1
    num_tiles = _round_up(num_tiles, split)
    tiles_per_split = num_tiles // split
    s_pad = num_tiles * tile_s
    if s_pad != S:
        # Zero padding is required for the analytic statistics correction below.
        x = jnp.pad(x, ((0, 0), (0, 0), (0, s_pad - S)))

    # Tiny weight re-orientations for the channels-first matmuls (kept f32 in
    # HBM; bf16 casts happen in-kernel).
    w1t = w1.T                     # (ndf, Cin)
    w2t = w2.T                     # (c2, ndf)
    b1c = b1.reshape(ndf, 1)
    w3c = w3.reshape(c2, 1)

    vmem_limit = 32 * 1024 * 1024  # explicit: >v5e's 16MiB default, <v7x's 64MiB

    sums, sqs = pl.pallas_call(
        _stats_kernel,
        out_shape=(
            jax.ShapeDtypeStruct((split, N, c2, 1), jnp.float32),
            jax.ShapeDtypeStruct((split, N, c2, 1), jnp.float32),
        ),
        grid_spec=pltpu.PrefetchScalarGridSpec(
            num_scalar_prefetch=0,
            grid=(split, N, tiles_per_split),
            in_specs=[
                pl.BlockSpec((None, Cin, tile_s),
                             lambda c, n, s: (n, 0, c * tiles_per_split + s)),
                pl.BlockSpec((ndf, Cin), lambda c, n, s: (0, 0)),
                pl.BlockSpec((ndf, 1), lambda c, n, s: (0, 0)),
                pl.BlockSpec((c2, ndf), lambda c, n, s: (0, 0)),
            ],
            out_specs=(
                pl.BlockSpec((None, None, c2, 1), lambda c, n, s: (c, n, 0, 0)),
                pl.BlockSpec((None, None, c2, 1), lambda c, n, s: (c, n, 0, 0)),
            ),
        ),
        compiler_params=pltpu.CompilerParams(
            dimension_semantics=("parallel", "parallel", "arbitrary"),
            vmem_limit_bytes=vmem_limit),
    )(x, w1t, b1c, w2t)

    # Padded x columns are exact zeros, so each pad column of h2 equals the
    # constant h2_pad = w2t_bf16 @ leaky(b1)_bf16 (same bf16 path as the
    # kernels). Correct the BatchNorm statistics analytically in the wrapper
    # instead of masking per-tile in the kernel.
    total_sum = sums.sum(axis=(0, 1))[:, 0]          # (c2,)
    total_sq = sqs.sum(axis=(0, 1))[:, 0]            # (c2,)
    n_pad_cols = N * (s_pad - S)
    if n_pad_cols:
        h1p = _leaky(b1).astype(jnp.bfloat16)                       # (ndf,)
        h2p = jnp.dot(w2t.astype(jnp.bfloat16), h1p,
                      preferred_element_type=jnp.float32)           # (c2,)
        total_sum = total_sum - n_pad_cols * h2p
        total_sq = total_sq - n_pad_cols * (h2p * h2p)

    # BatchNorm3d (training-mode batch statistics, biased variance) folded into
    # per-channel scale/shift; scale is further folded into the stage-2 weight.
    mean = total_sum / P
    var = jnp.maximum(total_sq / P - mean * mean, 0.0)
    inv_std = jax.lax.rsqrt(var + eps)
    scale = gamma * inv_std
    shift = beta - mean * scale
    w2ts = scale[:, None] * w2t                       # (c2, ndf), BN scale folded

    out = pl.pallas_call(
        _out_kernel,
        out_shape=jax.ShapeDtypeStruct((N, 1, s_pad), jnp.float32),
        grid_spec=pltpu.PrefetchScalarGridSpec(
            num_scalar_prefetch=0,
            grid=(N, num_tiles),
            in_specs=[
                pl.BlockSpec((None, Cin, tile_s), lambda n, s: (n, 0, s)),
                pl.BlockSpec((ndf, Cin), lambda n, s: (0, 0)),
                pl.BlockSpec((ndf, 1), lambda n, s: (0, 0)),
                pl.BlockSpec((c2, ndf), lambda n, s: (0, 0)),
                pl.BlockSpec((c2, 1), lambda n, s: (0, 0)),
                pl.BlockSpec((c2, 1), lambda n, s: (0, 0)),
            ],
            out_specs=pl.BlockSpec((None, 1, tile_s), lambda n, s: (n, 0, s)),
        ),
        compiler_params=pltpu.CompilerParams(
            dimension_semantics=("parallel", "parallel"),
            vmem_limit_bytes=vmem_limit),
    )(x, w1t, b1c, w2ts, shift.reshape(c2, 1), w3c)

    # (N, 1, S_pad) -> drop padding -> (N, 1, D, H, W); no transposes needed.
    return out[:, :, :S].reshape(N, 1, D, H, W)


# ------------------------- deterministic parameters --------------------------
def init_params(key, input_nc, ndf):
    k1, k2, k3, k4 = jax.random.split(key, 4)
    # Conv3d 1x1x1 weights stored as (in, out) matrices.
    w1 = 0.1 * jax.random.normal(k1, (input_nc, ndf), jnp.float32)
    b1 = 0.1 * jax.random.normal(k2, (ndf,), jnp.float32)
    w2 = 0.1 * jax.random.normal(k3, (ndf, 2 * ndf), jnp.float32)    # bias=False
    gamma = jnp.ones((2 * ndf,), jnp.float32)                        # BN affine
    beta = jnp.zeros((2 * ndf,), jnp.float32)
    w3 = 0.1 * jax.random.normal(k4, (2 * ndf, 1), jnp.float32)      # bias=False
    return (w1, b1, w2, gamma, beta, w3)


# ------------------------------ reference (jnp) -------------------------------
def reference(x_ncdhw, params, eps=1e-5):
    w1, b1, w2, gamma, beta, w3 = params
    N, Cin, D, H, W = x_ncdhw.shape
    x = jnp.transpose(x_ncdhw, (0, 2, 3, 4, 1)).reshape(-1, Cin)
    h1 = x @ w1 + b1
    h1 = jnp.where(h1 > 0, h1, 0.2 * h1)
    h2 = h1 @ w2
    mean = h2.mean(axis=0)
    var = h2.var(axis=0)  # biased, as in BatchNorm training forward
    y = (h2 - mean) / jnp.sqrt(var + eps) * gamma + beta
    y = jnp.where(y > 0, y, 0.2 * y)
    o = y @ w3
    return jnp.transpose(o.reshape(N, D, H, W, 1), (0, 4, 1, 2, 3))


if __name__ == "__main__":
    key = jax.random.PRNGKey(0)
    kx, kp = jax.random.split(key)

    Cin, ndf = 4, 64
    D, H, W = 6, 8, 9           # D*H*W = 432 (not a multiple of 128)
    params = init_params(kp, Cin, ndf)

    # Case 1: batch of 2, default tile size (exercises the padded-statistics
    # analytic correction).
    x = jax.random.normal(kx, (2, Cin, D, H, W), jnp.float32)
    out = jax.block_until_ready(pixel_discriminator(x, params))
    assert out.shape == (2, 1, D, H, W), out.shape
    ref = reference(x, params)
    err = float(jnp.max(jnp.abs(out - ref)))
    # bf16 MXU operands => looser tolerance than the f32-only version.
    assert jnp.allclose(out, ref, atol=5e-2, rtol=5e-2), err

    # Case 2: batch of 1 with small tiles (exercises the stage-1 spatial
    # core-split path that keeps v7x's second TensorCore busy when N == 1).
    x1 = x[:1]
    out1 = jax.block_until_ready(pixel_discriminator(x1, params, tile_s=128))
    assert out1.shape == (1, 1, D, H, W), out1.shape
    ref1 = reference(x1, params)
    err1 = float(jnp.max(jnp.abs(out1 - ref1)))
    assert jnp.allclose(out1, ref1, atol=5e-2, rtol=5e-2), err1

    # TODO(synk): use_sigmoid=True variant would just add jnp.sigmoid in
    # _out_kernel; InstanceNorm3d norm_layer variant not implemented.
    print("KERNEL_OK")
</pallas_src>

<mosaic_0001>
module attributes {stable_mosaic.version = 11 : i64} {
  func.func @_stats_kernel(%arg0: i32, %arg1: i32, %arg2: i32, %arg3: memref<1x4x512xf32, #tpu.memory_space<vmem>>, %arg4: memref<64x4xf32, #tpu.memory_space<vmem>>, %arg5: memref<64x1xf32, #tpu.memory_space<vmem>>, %arg6: memref<128x64xf32, #tpu.memory_space<vmem>>, %arg7: memref<1x1x128x1xf32, #tpu.memory_space<vmem>>, %arg8: memref<1x1x128x1xf32, #tpu.memory_space<vmem>>) attributes {dimension_semantics = [#tpu.dimension_semantics<parallel>, #tpu.dimension_semantics<parallel>, #tpu.dimension_semantics<arbitrary>], iteration_bounds = array<i64: 1, 2, 1>, scalar_prefetch = 0 : i64, scratch_operands = 0 : i64, tpu.core_type = #tpu.core_type<tc>, window_params = [{transform_indices = @transform_0, window_bounds = array<i64: 1, 4, 512>}, {pipeline_mode = #tpu.pipeline_mode<synchronous>, transform_indices = @transform_1, window_bounds = array<i64: 64, 4>}, {pipeline_mode = #tpu.pipeline_mode<synchronous>, transform_indices = @transform_2, window_bounds = array<i64: 64, 1>}, {pipeline_mode = #tpu.pipeline_mode<synchronous>, transform_indices = @transform_3, window_bounds = array<i64: 128, 64>}, {transform_indices = @transform_4, window_bounds = array<i64: 1, 1, 128, 1>}, {transform_indices = @transform_5, window_bounds = array<i64: 1, 1, 128, 1>}]} {
    %c0_i32 = arith.constant 0 : i32
    %0 = arith.cmpi eq, %arg2, %c0_i32 : i32
    %1 = arith.extui %0 : i1 to i32
    %c0_i32_0 = arith.constant 0 : i32
    %2 = arith.cmpi ne, %1, %c0_i32_0 : i32
    scf.if %2 {
      %cst_29 = arith.constant 0.000000e+00 : f32
      %36 = vector.broadcast %cst_29 : f32 to vector<128x1xf32>
      %c0_30 = arith.constant 0 : index
      %c0_31 = arith.constant 0 : index
      %c0_32 = arith.constant 0 : index
      %c0_33 = arith.constant 0 : index
      %37 = vector.load %arg7[%c0_30, %c0_31, %c0_32, %c0_33] : memref<1x1x128x1xf32, #tpu.memory_space<vmem>>, vector<1x1x128x1xf32>
      %38 = vector.shape_cast %37 : vector<1x1x128x1xf32> to vector<128x1xf32>
      %39 = vector.shape_cast %36 : vector<128x1xf32> to vector<1x1x128x1xf32>
      tpu.vector_store %arg7[%c0_30, %c0_31, %c0_32, %c0_33], %39 {strides = array<i32>} : memref<1x1x128x1xf32, #tpu.memory_space<vmem>>, vector<1x1x128x1xf32>,
      %cst_34 = arith.constant 0.000000e+00 : f32
      %40 = vector.broadcast %cst_34 : f32 to vector<128x1xf32>
      %c0_35 = arith.constant 0 : index
      %c0_36 = arith.constant 0 : index
      %c0_37 = arith.constant 0 : index
      %c0_38 = arith.constant 0 : index
      %41 = vector.load %arg8[%c0_35, %c0_36, %c0_37, %c0_38] : memref<1x1x128x1xf32, #tpu.memory_space<vmem>>, vector<1x1x128x1xf32>
      %42 = vector.shape_cast %41 : vector<1x1x128x1xf32> to vector<128x1xf32>
      %43 = vector.shape_cast %40 : vector<128x1xf32> to vector<1x1x128x1xf32>
      tpu.vector_store %arg8[%c0_35, %c0_36, %c0_37, %c0_38], %43 {strides = array<i32>} : memref<1x1x128x1xf32, #tpu.memory_space<vmem>>, vector<1x1x128x1xf32>,
    } else {
    }
    %c0 = arith.constant 0 : index
    %c0_1 = arith.constant 0 : index
    %c0_2 = arith.constant 0 : index
    %3 = vector.load %arg3[%c0, %c0_1, %c0_2] : memref<1x4x512xf32, #tpu.memory_space<vmem>>, vector<1x4x512xf32>
    %4 = vector.shape_cast %3 : vector<1x4x512xf32> to vector<4x512xf32>
    %5 = arith.truncf %4 : vector<4x512xf32> to vector<4x512xbf16>
    %c0_3 = arith.constant 0 : index
    %c0_4 = arith.constant 0 : index
    %6 = vector.load %arg4[%c0_3, %c0_4] : memref<64x4xf32, #tpu.memory_space<vmem>>, vector<64x4xf32>
    %7 = arith.truncf %6 : vector<64x4xf32> to vector<64x4xbf16>
    %c0_5 = arith.constant 0 : index
    %c0_6 = arith.constant 0 : index
    %8 = vector.load %arg6[%c0_5, %c0_6] : memref<128x64xf32, #tpu.memory_space<vmem>>, vector<128x64xf32>
    %9 = arith.truncf %8 : vector<128x64xf32> to vector<128x64xbf16>
    %cst = arith.constant dense<0.000000e+00> : vector<64x512xf32>
    %10 = tpu.matmul %7, %5, %cst {dimension_numbers = #tpu.dot_dimension_numbers<[1], [0], [0], [1], [0, 0, 1, 1], [], []>} : vector<64x4xbf16>, vector<4x512xbf16>, vector<64x512xf32> -> vector<64x512xf32>
    %c0_7 = arith.constant 0 : index
    %c0_8 = arith.constant 0 : index
    %11 = vector.load %arg5[%c0_7, %c0_8] : memref<64x1xf32, #tpu.memory_space<vmem>>, vector<64x1xf32>
    %12 = vector.broadcast %11 : vector<64x1xf32> to vector<64x512xf32>
    %13 = arith.addf %10, %12 : vector<64x512xf32>
    %cst_9 = arith.constant 2.000000e-01 : f32
    %14 = vector.broadcast %cst_9 : f32 to vector<64x512xf32>
    %15 = arith.mulf %14, %13 : vector<64x512xf32>
    %16 = arith.maximumf %13, %15 : vector<64x512xf32>
    %17 = arith.truncf %16 : vector<64x512xf32> to vector<64x512xbf16>
    %cst_10 = arith.constant dense<0.000000e+00> : vector<128x512xf32>
    %18 = tpu.matmul %9, %17, %cst_10 {dimension_numbers = #tpu.dot_dimension_numbers<[1], [0], [0], [1], [0, 0, 1, 1], [], []>} : vector<128x64xbf16>, vector<64x512xbf16>, vector<128x512xf32> -> vector<128x512xf32>
    %c0_11 = arith.constant 0 : index
    %c0_12 = arith.constant 0 : index
    %c0_13 = arith.constant 0 : index
    %c0_14 = arith.constant 0 : index
    %19 = vector.load %arg7[%c0_11, %c0_12, %c0_13, %c0_14] : memref<1x1x128x1xf32, #tpu.memory_space<vmem>>, vector<1x1x128x1xf32>
    %20 = vector.shape_cast %19 : vector<1x1x128x1xf32> to vector<128x1xf32>
    %cst_15 = arith.constant dense<0.000000e+00> : vector<128xf32>
    %21 = vector.multi_reduction <add>, %18, %cst_15 [1] : vector<128x512xf32> to vector<128xf32>
    %22 = vector.shape_cast %21 : vector<128xf32> to vector<128x1xf32>
    %23 = arith.addf %20, %22 : vector<128x1xf32>
    %c0_16 = arith.constant 0 : index
    %c0_17 = arith.constant 0 : index
    %c0_18 = arith.constant 0 : index
    %c0_19 = arith.constant 0 : index
    %24 = vector.load %arg7[%c0_16, %c0_17, %c0_18, %c0_19] : memref<1x1x128x1xf32, #tpu.memory_space<vmem>>, vector<1x1x128x1xf32>
    %25 = vector.shape_cast %24 : vector<1x1x128x1xf32> to vector<128x1xf32>
    %26 = vector.shape_cast %23 : vector<128x1xf32> to vector<1x1x128x1xf32>
    tpu.vector_store %arg7[%c0_16, %c0_17, %c0_18, %c0_19], %26 {strides = array<i32>} : memref<1x1x128x1xf32, #tpu.memory_space<vmem>>, vector<1x1x128x1xf32>,
    %c0_20 = arith.constant 0 : index
    %c0_21 = arith.constant 0 : index
    %c0_22 = arith.constant 0 : index
    %c0_23 = arith.constant 0 : index
    %27 = vector.load %arg8[%c0_20, %c0_21, %c0_22, %c0_23] : memref<1x1x128x1xf32, #tpu.memory_space<vmem>>, vector<1x1x128x1xf32>
    %28 = vector.shape_cast %27 : vector<1x1x128x1xf32> to vector<128x1xf32>
    %29 = arith.mulf %18, %18 : vector<128x512xf32>
    %cst_24 = arith.constant dense<0.000000e+00> : vector<128xf32>
    %30 = vector.multi_reduction <add>, %29, %cst_24 [1] : vector<128x512xf32> to vector<128xf32>
    %31 = vector.shape_cast %30 : vector<128xf32> to vector<128x1xf32>
    %32 = arith.addf %28, %31 : vector<128x1xf32>
    %c0_25 = arith.constant 0 : index
    %c0_26 = arith.constant 0 : index
    %c0_27 = arith.constant 0 : index
    %c0_28 = arith.constant 0 : index
    %33 = vector.load %arg8[%c0_25, %c0_26, %c0_27, %c0_28] : memref<1x1x128x1xf32, #tpu.memory_space<vmem>>, vector<1x1x128x1xf32>
    %34 = vector.shape_cast %33 : vector<1x1x128x1xf32> to vector<128x1xf32>
    %35 = vector.shape_cast %32 : vector<128x1xf32> to vector<1x1x128x1xf32>
    tpu.vector_store %arg8[%c0_25, %c0_26, %c0_27, %c0_28], %35 {strides = array<i32>} : memref<1x1x128x1xf32, #tpu.memory_space<vmem>>, vector<1x1x128x1xf32>,
    return
  }
  func.func @transform_0(%arg0: i32, %arg1: i32, %arg2: i32) -> (i32, i32, i32) {
    %c1_i32 = arith.constant 1 : i32
    %0 = arith.muli %arg0, %c1_i32 : i32
    %1 = arith.addi %0, %arg2 : i32
    %c0_i32 = arith.constant 0 : i32
    %c0_i32_0 = arith.constant 0 : i32
    return %arg1, %c0_i32, %1 : i32, i32, i32
  }
  func.func @transform_1(%arg0: i32, %arg1: i32, %arg2: i32) -> (i32, i32) {
    %c0_i32 = arith.constant 0 : i32
    %c0_i32_0 = arith.constant 0 : i32
    %c0_i32_1 = arith.constant 0 : i32
    return %c0_i32, %c0_i32_0 : i32, i32
  }
  func.func @transform_2(%arg0: i32, %arg1: i32, %arg2: i32) -> (i32, i32) {
    %c0_i32 = arith.constant 0 : i32
    %c0_i32_0 = arith.constant 0 : i32
    %c0_i32_1 = arith.constant 0 : i32
    return %c0_i32, %c0_i32_0 : i32, i32
  }
  func.func @transform_3(%arg0: i32, %arg1: i32, %arg2: i32) -> (i32, i32) {
    %c0_i32 = arith.constant 0 : i32
    %c0_i32_0 = arith.constant 0 : i32
    %c0_i32_1 = arith.constant 0 : i32
    return %c0_i32, %c0_i32_0 : i32, i32
  }
  func.func @transform_4(%arg0: i32, %arg1: i32, %arg2: i32) -> (i32, i32, i32, i32) {
    %c0_i32 = arith.constant 0 : i32
    %c0_i32_0 = arith.constant 0 : i32
    %c0_i32_1 = arith.constant 0 : i32
    return %arg0, %arg1, %c0_i32, %c0_i32_0 : i32, i32, i32, i32
  }
  func.func @transform_5(%arg0: i32, %arg1: i32, %arg2: i32) -> (i32, i32, i32, i32) {
    %c0_i32 = arith.constant 0 : i32
    %c0_i32_0 = arith.constant 0 : i32
    %c0_i32_1 = arith.constant 0 : i32
    return %arg0, %arg1, %c0_i32, %c0_i32_0 : i32, i32, i32, i32
  }
}

</mosaic_0001>

<llo_original>
// kernel: tpu_custom_call.1
$region0: #{tpu_custom_call.1}
  #allocation0 [shape = 'u32[]', space=smem, size = 0x4, offset = 0x4, fixed_abs, tag = 'smem constant byte address 0x4 - core index']
  #allocation1 [shape = 'u32[144,128]{1,0:T(1,128)}', space=vmem, size = 0x12000, scoped, tag = 'internal scratch']
  %s0 = inlined_call_operand.vmem [shape: f32[2,4,512], index: 0, kind: input, shape index: {}]
  %s1 = inlined_call_operand.vmem [shape: f32[64,4], index: 1, kind: input, shape index: {}]
  %s2 = inlined_call_operand.vmem [shape: f32[64,1], index: 2, kind: input, shape index: {}]
  %s3 = inlined_call_operand.vmem [shape: f32[128,64], index: 3, kind: input, shape index: {}]
  %s4 = inlined_call_operand.vmem [shape: f32[1,2,128,1], index: 4, kind: output, shape index: {0}]
  %s5 = inlined_call_operand.vmem [shape: f32[1,2,128,1], index: 5, kind: output, shape index: {1}]
  %6 = xla_tuple %s4, %s5
  %s7 = sld [smem:[#allocation0]]
  $region61: #{tpu_custom_call.1} parent=0
    _
  %s9 = ssub.s32 1, %s7
  %s10 = scalar_select 0, %s9, %s7
  loop: start=0, step=1, limit=4
  $region2: #{tpu_custom_call.1} parent=0 // loop_pre_header
    _
  $region3: #{tpu_custom_call.1} parent=0 // loop_header
    %s12 = sphi 0, %s16
    %p13 = scmp.ge.s32.totalorder %s12, 4
    %s19 = sphi 0, %s38
    %s20 = sphi 0, %s34
    %s21 = sphi 0, %s30
    %s22 = sphi 0, %s19
    %s23 = sphi 0, %s20
    %s24 = sphi 0, %s21
    %s25 = sphi 0, %s22
    %s26 = sphi 0, %s23
    %s27 = sphi 0, %s24
    %s45 = sphi 0, %s47
    %s48 = sphi 0, %s45
    %s49 = sphi 0, %s48
    %s65 = sphi 0, %s49
    %s69 = sphi 0, %s69
    %s71 = sphi 0, %s69
    %s72 = sphi 0, %s71
    %s86 = sphi 0, %s72
    %s90 = sphi 0, %s90
    %s92 = sphi 0, %s90
    %s93 = sphi 0, %s92
    %s107 = sphi 0, %s93
    %s111 = sphi 0, %s111
    %s113 = sphi 0, %s111
    %s114 = sphi 0, %s113
    %s128 = sphi 0, %s114
    %s136 = sphi 0, %s138
    %s139 = sphi 0, %s136
    %s140 = sphi 0, %s139
    %s156 = sphi 0, %s140
    %s164 = sphi 0, %s166
    %s167 = sphi 0, %s164
    %s168 = sphi 0, %s167
    %s184 = sphi 0, %s168
  $region4: #{tpu_custom_call.1} parent=0 // loop_header_branch
    %15 = sbr.rel (%p13) target = $region8
  $region5: #{tpu_custom_call.1} parent=0 // loop_body
    %s17 = ssub.s32 %s12, 1
    %s18 = ssub.s32 %s12, 2
    %s28 = sadd.s32 1, %s21
    %p29 = scmp.ge.s32.totalorder %s28, 1
    %s30 = scalar_select %p29, 0, %s28
    %s31 = sadd.s32 1, %s20
    %s32 = scalar_select %p29, %s31, %s20
    %p33 = scmp.ge.s32.totalorder %s32, 2
    %s34 = scalar_select %p33, 0, %s32
    %s35 = sadd.s32 1, %s19
    %s36 = scalar_select %p33, %s35, %s19
    %p37 = scmp.ge.s32.totalorder %s36, 1
    %s38 = scalar_select %p37, 0, %s36
    %s39 = sadd.s32 %s19, %s21
    %s40 = sadd.s32 %s38, %s30
    %s41 = ssub.s32 %s20, %s34
    %s42 = ssub.s32 %s39, %s40
    %s43 = sor.u32 %s41, %s42
    %p44 = scmp.eq.s32.totalorder %s43, 0
    %s46 = sadd.s32 %s45, 1
    %s47 = scalar_select %p44, %s45, %s46
    %p50 = pneg %p44
    %p51 = scmp.eq.s32.totalorder %s12, 1
    %p52 = por %p50, %p51
    %p53 = scmp.ne.s32.totalorder %s45, %s48
    %p54 = scmp.eq.s32.totalorder %s12, 0
    %p55 = por %p53, %p54
    %p56 = scmp.ne.s32.totalorder %s45, %s48
    %p57 = scmp.eq.s32.totalorder %s17, 1
    %p58 = por %p56, %p57
    %p59 = scmp.ne.s32.totalorder %s48, %s49
    %p60 = scmp.eq.s32.totalorder %s17, 0
    %p61 = por %p59, %p60
    %p62 = scmp.ne.s32.totalorder %s48, %s49
    %p63 = scmp.eq.s32.totalorder %s18, 1
    %p64 = por %p62, %p63
    %p66 = scmp.ne.s32.totalorder %s49, %s65
    %p67 = scmp.eq.s32.totalorder %s18, 0
    %p68 = por %p66, %p67
    %s70 = sadd.s32 %s69, 1
    %p73 = scmp.eq.s32.totalorder %s12, 1
    %p74 = scmp.ne.s32.totalorder %s69, %s71
    %p75 = scmp.eq.s32.totalorder %s12, 0
    %p76 = por %p74, %p75
    %p77 = scmp.ne.s32.totalorder %s69, %s71
    %p78 = scmp.eq.s32.totalorder %s17, 1
    %p79 = por %p77, %p78
    %p80 = scmp.ne.s32.totalorder %s71, %s72
    %p81 = scmp.eq.s32.totalorder %s17, 0
    %p82 = por %p80, %p81
    %p83 = scmp.ne.s32.totalorder %s71, %s72
    %p84 = scmp.eq.s32.totalorder %s18, 1
    %p85 = por %p83, %p84
    %p87 = scmp.ne.s32.totalorder %s72, %s86
    %p88 = scmp.eq.s32.totalorder %s18, 0
    %p89 = por %p87, %p88
    %s91 = sadd.s32 %s90, 1
    %p94 = scmp.eq.s32.totalorder %s12, 1
    %p95 = scmp.ne.s32.totalorder %s90, %s92
    %p96 = scmp.eq.s32.totalorder %s12, 0
    %p97 = por %p95, %p96
    %p98 = scmp.ne.s32.totalorder %s90, %s92
    %p99 = scmp.eq.s32.totalorder %s17, 1
    %p100 = por %p98, %p99
    %p101 = scmp.ne.s32.totalorder %s92, %s93
    %p102 = scmp.eq.s32.totalorder %s17, 0
    %p103 = por %p101, %p102
    %p104 = scmp.ne.s32.totalorder %s92, %s93
    %p105 = scmp.eq.s32.totalorder %s18, 1
    %p106 = por %p104, %p105
    %p108 = scmp.ne.s32.totalorder %s93, %s107
    %p109 = scmp.eq.s32.totalorder %s18, 0
    %p110 = por %p108, %p109
    %s112 = sadd.s32 %s111, 1
    %p115 = scmp.eq.s32.totalorder %s12, 1
    %p116 = scmp.ne.s32.totalorder %s111, %s113
    %p117 = scmp.eq.s32.totalorder %s12, 0
    %p118 = por %p116, %p117
    %p119 = scmp.ne.s32.totalorder %s111, %s113
    %p120 = scmp.eq.s32.totalorder %s17, 1
    %p121 = por %p119, %p120
    %p122 = scmp.ne.s32.totalorder %s113, %s114
    %p123 = scmp.eq.s32.totalorder %s17, 0
    %p124 = por %p122, %p123
    %p125 = scmp.ne.s32.totalorder %s113, %s114
    %p126 = scmp.eq.s32.totalorder %s18, 1
    %p127 = por %p125, %p126
    %p129 = scmp.ne.s32.totalorder %s114, %s128
    %p130 = scmp.eq.s32.totalorder %s18, 0
    %p131 = por %p129, %p130
    %s132 = ssub.s32 %s19, %s38
    %s133 = ssub.s32 %s20, %s34
    %s134 = sor.u32 %s132, %s133
    %p135 = scmp.eq.s32.totalorder %s134, 0
    %s137 = sadd.s32 %s136, 1
    %s138 = scalar_select %p135, %s136, %s137
    %p141 = pneg %p135
    %p142 = scmp.eq.s32.totalorder %s12, 1
    %p143 = por %p141, %p142
    %p144 = scmp.ne.s32.totalorder %s136, %s139
    %p145 = scmp.eq.s32.totalorder %s12, 0
    %p146 = por %p144, %p145
    %p147 = scmp.ne.s32.totalorder %s136, %s139
    %p148 = scmp.eq.s32.totalorder %s17, 1
    %p149 = por %p147, %p148
    %p150 = scmp.ne.s32.totalorder %s139, %s140
    %p151 = scmp.eq.s32.totalorder %s17, 0
    %p152 = por %p150, %p151
    %p153 = scmp.ne.s32.totalorder %s139, %s140
    %p154 = scmp.eq.s32.totalorder %s18, 1
    %p155 = por %p153, %p154
    %p157 = scmp.ne.s32.totalorder %s140, %s156
    %p158 = scmp.eq.s32.totalorder %s18, 0
    %p159 = por %p157, %p158
    %s160 = ssub.s32 %s19, %s38
    %s161 = ssub.s32 %s20, %s34
    %s162 = sor.u32 %s160, %s161
    %p163 = scmp.eq.s32.totalorder %s162, 0
    %s165 = sadd.s32 %s164, 1
    %s166 = scalar_select %p163, %s164, %s165
    %p169 = pneg %p163
    %p170 = scmp.eq.s32.totalorder %s12, 1
    %p171 = por %p169, %p170
    %p172 = scmp.ne.s32.totalorder %s164, %s167
    %p173 = scmp.eq.s32.totalorder %s12, 0
    %p174 = por %p172, %p173
    %p175 = scmp.ne.s32.totalorder %s164, %s167
    %p176 = scmp.eq.s32.totalorder %s17, 1
    %p177 = por %p175, %p176
    %p178 = scmp.ne.s32.totalorder %s167, %s168
    %p179 = scmp.eq.s32.totalorder %s17, 0
    %p180 = por %p178, %p179
    %p181 = scmp.ne.s32.totalorder %s167, %s168
    %p182 = scmp.eq.s32.totalorder %s18, 1
    %p183 = por %p181, %p182
    %p185 = scmp.ne.s32.totalorder %s168, %s184
    %p186 = scmp.eq.s32.totalorder %s18, 0
    %p187 = por %p185, %p186
    %p188 = scmp.le.s32.totalorder 1, %s12
    %p189 = scmp.lt.s32.totalorder %s12, 3
    %p190 = pnand %p188, %p189
    %p191 = pneg %p190
    // Predicated region
    $region9: #{tpu_custom_call.1} parent=5 // pred_check
      _
    $region10: #{tpu_custom_call.1} parent=5 // pred_check_branch
      %193 = sbr.rel (%p190) target = $region12
    $region11: #{tpu_custom_call.1} parent=5 // pred_region
      %s194 = ssub.s32 %s12, 1
      // Predicated region
      $region13: #{tpu_custom_call.1} parent=11 // pred_check
        %p195 = pneg %p82
      $region14: #{tpu_custom_call.1} parent=11 // pred_check_branch
        %197 = sbr.rel (%p195) target = $region16
      $region15: #{tpu_custom_call.1} parent=11 // pred_region
        _
      $region16: #{tpu_custom_call.1} parent=11 // pred_fallthru
        _
      // Predicated region
      $region17: #{tpu_custom_call.1} parent=11 // pred_check
        %p198 = pneg %p103
      $region18: #{tpu_custom_call.1} parent=11 // pred_check_branch
        %200 = sbr.rel (%p198) target = $region20
      $region19: #{tpu_custom_call.1} parent=11 // pred_region
        _
      $region20: #{tpu_custom_call.1} parent=11 // pred_fallthru
        _
      // Predicated region
      $region21: #{tpu_custom_call.1} parent=11 // pred_check
        %p201 = pneg %p124
      $region22: #{tpu_custom_call.1} parent=11 // pred_check_branch
        %203 = sbr.rel (%p201) target = $region24
      $region23: #{tpu_custom_call.1} parent=11 // pred_region
        _
      $region24: #{tpu_custom_call.1} parent=11 // pred_fallthru
        _
    $region12: #{tpu_custom_call.1} parent=5 // pred_fallthru
      _
    %p204 = scmp.lt.s32.totalorder %s12, 2
    // Predicated region
    $region25: #{tpu_custom_call.1} parent=5 // pred_check
      %p205 = pneg %p204
    $region26: #{tpu_custom_call.1} parent=5 // pred_check_branch
      %207 = sbr.rel (%p205) target = $region28
    $region27: #{tpu_custom_call.1} parent=5 // pred_region
      // Predicated region
      $region29: #{tpu_custom_call.1} parent=27 // pred_check
        %p208 = pneg %p55
      $region30: #{tpu_custom_call.1} parent=27 // pred_check_branch
        %210 = sbr.rel (%p208) target = $region32
      $region31: #{tpu_custom_call.1} parent=27 // pred_region
        %s211 = sadd.s32 %s19, %s21
        %s212 = smul.u32 4, %s211
        %p213 = scmp.lt.s32.totalorder %s20, 1
        %s214 = scalar_select %p213, %s20, 1
        %p215 = scmp.lt.s32.totalorder %s212, 3
        %s216 = scalar_select %p215, %s212, 3
        %s217 = smul.addr %s214, 4
        %s218 = sadd.s32 %s216, %s217
        %s219 = smul.addr %s218, 4
        %s220 = scalar_lea.vmem %s0, %s219
        %s221 = sadd.s32 %s19, %s21
        %s222 = smul.u32 4, %s221
      $region32: #{tpu_custom_call.1} parent=27 // pred_fallthru
        _
    $region28: #{tpu_custom_call.1} parent=5 // pred_fallthru
      _
    %p223 = scmp.le.s32.totalorder 1, %s12
    %p224 = scmp.lt.s32.totalorder %s12, 3
    %p225 = pnand %p223, %p224
    %p226 = pneg %p225
    // Predicated region
    $region33: #{tpu_custom_call.1} parent=5 // pred_check
      _
    $region34: #{tpu_custom_call.1} parent=5 // pred_check_branch
      %228 = sbr.rel (%p225) target = $region36
    $region35: #{tpu_custom_call.1} parent=5 // pred_region
      %s229 = ssub.s32 %s12, 1
      %s230 = sadd.s32 %s22, %s24
      %s231 = smul.u32 4, %s230
      %p232 = scmp.lt.s32.totalorder %s23, 1
      %s233 = scalar_select %p232, %s23, 1
      %p234 = scmp.lt.s32.totalorder %s231, 3
      %s235 = scalar_select %p234, %s231, 3
      %s236 = smul.addr %s233, 4
      %s237 = sadd.s32 %s235, %s236
      %s238 = smul.addr %s237, 4
      %s239 = scalar_lea.vmem %s0, %s238
      %p240 = pneg %p61
      %p241 = pneg %p58
      %p242 = pneg %p82
      %p243 = pneg %p79
      %p244 = pneg %p103
      %p245 = pneg %p100
      %p246 = pneg %p124
      %p247 = pneg %p121
      %p248 = pneg %p152
      %p249 = pneg %p149
      %p250 = scmp.lt.s32.totalorder %s22, 0
      %s251 = scalar_select %p250, %s22, 0
      %p252 = scmp.lt.s32.totalorder %s23, 1
      %s253 = scalar_select %p252, %s23, 1
      %s254 = smul.addr %s253, 16
      %s255 = smul.addr %s251, 32
      %s256 = sadd.s32 %s254, %s255
      %s257 = smul.addr %s256, 8
      %s258 = scalar_lea.vmem %s4, %s257
      %p259 = pneg %p180
      %p260 = pneg %p177
      %p261 = scmp.lt.s32.totalorder %s22, 0
      %s262 = scalar_select %p261, %s22, 0
      %p263 = scmp.lt.s32.totalorder %s23, 1
      %s264 = scalar_select %p263, %s23, 1
      %s265 = smul.addr %s264, 16
      %s266 = smul.addr %s262, 32
      %s267 = sadd.s32 %s265, %s266
      %s268 = smul.addr %s267, 8
      %s269 = scalar_lea.vmem %s5, %s268
      %s270 = sadd.s32 %s22, %s24
      %s271 = smul.u32 4, %s270
      %p272 = scmp.lt.s32.totalorder %s23, 1
      %s273 = scalar_select %p272, %s23, 1
      %p274 = scmp.lt.s32.totalorder %s271, 3
      %s275 = scalar_select %p274, %s271, 3
      %s276 = smul.addr %s273, 4
      %s277 = sadd.s32 %s275, %s276
      %s278 = smul.addr %s277, 4
      %s279 = scalar_lea.vmem %s0, %s278
      %s280 = sadd.s32 %s22, %s24
      %s281 = smul.u32 4, %s280
      %p282 = scmp.lt.s32.totalorder %s22, 0
      %s283 = scalar_select %p282, %s22, 0
      %p284 = scmp.lt.s32.totalorder %s23, 1
      %s285 = scalar_select %p284, %s23, 1
      %s286 = smul.addr %s285, 16
      %s287 = smul.addr %s283, 32
      %s288 = sadd.s32 %s286, %s287
      %s289 = smul.addr %s288, 8
      %s290 = scalar_lea.vmem %s4, %s289
      %p291 = scmp.lt.s32.totalorder %s22, 0
      %s292 = scalar_select %p291, %s22, 0
      %p293 = scmp.lt.s32.totalorder %s23, 1
      %s294 = scalar_select %p293, %s23, 1
      %s295 = smul.addr %s294, 16
      %s296 = smul.addr %s292, 32
      %s297 = sadd.s32 %s295, %s296
      %s298 = smul.addr %s297, 8
      %s299 = scalar_lea.vmem %s5, %s298
      %p301 = scmp.eq.s32.totalorder %s24, 0
      // Predicated region
      $region37: #{tpu_custom_call.1} parent=35 // pred_check
        %p302 = pneg %p301
      $region38: #{tpu_custom_call.1} parent=35 // pred_check_branch
        %304 = sbr.rel (%p302) target = $region40
      $region39: #{tpu_custom_call.1} parent=35 // pred_region
        %vm305 = vcmask 7168
        %306 = vst.msk [vmem:[%s290] sm:$0xff] %vm305, 0.0
        %307 = vst.msk [vmem:[%s290 + $0x8] sm:$0xff] %vm305, 0.0
        %308 = vst.msk [vmem:[%s290 + $0x10] sm:$0xff] %vm305, 0.0
        %309 = vst.msk [vmem:[%s290 + $0x18] sm:$0xff] %vm305, 0.0
        %310 = vst.msk [vmem:[%s290 + $0x20] sm:$0xff] %vm305, 0.0
        %311 = vst.msk [vmem:[%s290 + $0x28] sm:$0xff] %vm305, 0.0
        %312 = vst.msk [vmem:[%s290 + $0x30] sm:$0xff] %vm305, 0.0
        %313 = vst.msk [vmem:[%s290 + $0x38] sm:$0xff] %vm305, 0.0
        %314 = vst.msk [vmem:[%s290 + $0x40] sm:$0xff] %vm305, 0.0
        %315 = vst.msk [vmem:[%s290 + $0x48] sm:$0xff] %vm305, 0.0
        %316 = vst.msk [vmem:[%s290 + $0x50] sm:$0xff] %vm305, 0.0
        %317 = vst.msk [vmem:[%s290 + $0x58] sm:$0xff] %vm305, 0.0
        %318 = vst.msk [vmem:[%s290 + $0x60] sm:$0xff] %vm305, 0.0
        %319 = vst.msk [vmem:[%s290 + $0x68] sm:$0xff] %vm305, 0.0
        %320 = vst.msk [vmem:[%s290 + $0x70] sm:$0xff] %vm305, 0.0
        %321 = vst.msk [vmem:[%s290 + $0x78] sm:$0xff] %vm305, 0.0
        %322 = vst.msk [vmem:[%s299] sm:$0xff] %vm305, 0.0
        %323 = vst.msk [vmem:[%s299 + $0x8] sm:$0xff] %vm305, 0.0
        %324 = vst.msk [vmem:[%s299 + $0x10] sm:$0xff] %vm305, 0.0
        %325 = vst.msk [vmem:[%s299 + $0x18] sm:$0xff] %vm305, 0.0
        %326 = vst.msk [vmem:[%s299 + $0x20] sm:$0xff] %vm305, 0.0
        %327 = vst.msk [vmem:[%s299 + $0x28] sm:$0xff] %vm305, 0.0
        %328 = vst.msk [vmem:[%s299 + $0x30] sm:$0xff] %vm305, 0.0
        %329 = vst.msk [vmem:[%s299 + $0x38] sm:$0xff] %vm305, 0.0
        %330 = vst.msk [vmem:[%s299 + $0x40] sm:$0xff] %vm305, 0.0
        %331 = vst.msk [vmem:[%s299 + $0x48] sm:$0xff] %vm305, 0.0
        %332 = vst.msk [vmem:[%s299 + $0x50] sm:$0xff] %vm305, 0.0
        %333 = vst.msk [vmem:[%s299 + $0x58] sm:$0xff] %vm305, 0.0
        %334 = vst.msk [vmem:[%s299 + $0x60] sm:$0xff] %vm305, 0.0
        %335 = vst.msk [vmem:[%s299 + $0x68] sm:$0xff] %vm305, 0.0
        %336 = vst.msk [vmem:[%s299 + $0x70] sm:$0xff] %vm305, 0.0
        %337 = vst.msk [vmem:[%s299 + $0x78] sm:$0xff] %vm305, 0.0
      $region40: #{tpu_custom_call.1} parent=35 // pred_fallthru
        _
      %v338 = vld [vmem:[%s279] sm:$0xff]
      %v339 = vld [vmem:[%s279 + $0x8] sm:$0xff]
      %v342 = vcombine.high %v338, %v338
      %v343 = vcombine.high %v339, %v339
      %v346 = vpack.c.bf16 %v338, %v338
      %v347 = vpack.c.bf16 %v342, %v342
      %v348 = vpack.c.bf16 %v339, %v339
      %v349 = vpack.c.bf16 %v343, %v343
      %v350 = vld [vmem:[%s1] sm:$0xff]
      %v351 = vld [vmem:[%s1 + $0x8] sm:$0xff]
      %v352 = vld [vmem:[%s1 + $0x10] sm:$0xff]
      %v353 = vld [vmem:[%s1 + $0x18] sm:$0xff]
      %v354 = vld [vmem:[%s1 + $0x20] sm:$0xff]
      %v355 = vld [vmem:[%s1 + $0x28] sm:$0xff]
      %v356 = vld [vmem:[%s1 + $0x30] sm:$0xff]
      %v357 = vld [vmem:[%s1 + $0x38] sm:$0xff]
      %v358 = vpack.c.bf16 %v351, %v350
      %v359 = vpack.c.bf16 %v353, %v352
      %v360 = vpack.c.bf16 %v355, %v354
      %v361 = vpack.c.bf16 %v357, %v356
      %v362 = vld [vmem:[%s3] sm:$0xff]
      %v363 = vld [vmem:[%s3 + $0x8] sm:$0xff]
      %v364 = vld [vmem:[%s3 + $0x10] sm:$0xff]
      %v365 = vld [vmem:[%s3 + $0x18] sm:$0xff]
      %v366 = vld [vmem:[%s3 + $0x20] sm:$0xff]
      %v367 = vld [vmem:[%s3 + $0x28] sm:$0xff]
      %v368 = vld [vmem:[%s3 + $0x30] sm:$0xff]
      %v369 = vld [vmem:[%s3 + $0x38] sm:$0xff]
      %v370 = vld [vmem:[%s3 + $0x40] sm:$0xff]
      %v371 = vld [vmem:[%s3 + $0x48] sm:$0xff]
      %v372 = vld [vmem:[%s3 + $0x50] sm:$0xff]
      %v373 = vld [vmem:[%s3 + $0x58] sm:$0xff]
      %v374 = vld [vmem:[%s3 + $0x60] sm:$0xff]
      %v375 = vld [vmem:[%s3 + $0x68] sm:$0xff]
      %v376 = vld [vmem:[%s3 + $0x70] sm:$0xff]
      %v377 = vld [vmem:[%s3 + $0x78] sm:$0xff]
      %v378 = vpack.c.bf16 %v363, %v362
      %v379 = vpack.c.bf16 %v365, %v364
      %v380 = vpack.c.bf16 %v367, %v366
      %v381 = vpack.c.bf16 %v369, %v368
      %v382 = vpack.c.bf16 %v371, %v370
      %v383 = vpack.c.bf16 %v373, %v372
      %v384 = vpack.c.bf16 %v375, %v374
      %v385 = vpack.c.bf16 %v377, %v376
      %v386 = vld [vmem:[%s2] sm:$0xff]
      %v387 = vld [vmem:[%s2 + $0x8] sm:$0xff]
      %v388 = vld [vmem:[%s2 + $0x10] sm:$0xff]
      %v389 = vld [vmem:[%s2 + $0x18] sm:$0xff]
      %v390 = vld [vmem:[%s2 + $0x20] sm:$0xff]
      %v391 = vld [vmem:[%s2 + $0x28] sm:$0xff]
      %v392 = vld [vmem:[%s2 + $0x30] sm:$0xff]
      %v393 = vld [vmem:[%s2 + $0x38] sm:$0xff]
      %395 = vset.pattern.permute.xlu0 0
      %396 = vperm.xlu0 %395, %v386
      %v397 = vpop.permute.xlu0 %396
      %400 = vset.pattern.permute.xlu0 0
      %401 = vperm.xlu0 %400, %v387
      %v402 = vpop.permute.xlu0 %401
      %405 = vset.pattern.permute.xlu0 0
      %406 = vperm.xlu0 %405, %v388
      %v407 = vpop.permute.xlu0 %406
      %410 = vset.pattern.permute.xlu0 0
      %411 = vperm.xlu0 %410, %v389
      %v412 = vpop.permute.xlu0 %411
      %415 = vset.pattern.permute.xlu0 0
      %416 = vperm.xlu0 %415, %v390
      %v417 = vpop.permute.xlu0 %416
      %420 = vset.pattern.permute.xlu0 0
      %421 = vperm.xlu0 %420, %v391
      %v422 = vpop.permute.xlu0 %421
      %425 = vset.pattern.permute.xlu0 0
      %426 = vperm.xlu0 %425, %v392
      %v427 = vpop.permute.xlu0 %426
      %430 = vset.pattern.permute.xlu0 0
      %431 = vperm.xlu0 %430, %v393
      %v432 = vpop.permute.xlu0 %431
      %vm434 = vcmask 31744
      %v436 = vsel %vm434, %v358, 0
      %v439 = vsel %vm434, %v359, 0
      %v442 = vsel %vm434, %v360, 0
      %v445 = vsel %vm434, %v361, 0
      %vm447 = vcmask 1041408
      %v449 = vsel %vm447, %v346, 0
      %v452 = vsel %vm447, %v347, 0
      %v455 = vsel %vm447, %v348, 0
      %v458 = vsel %vm447, %v349, 0
      %460 = vmatprep.subr.bf16.mxu0 %v452
      %461 = vmatpush1.bf16.msra.mxu0 %v449
      %462 = vmatprep.subr.bf16.mxu0 0
      %463 = vmatpush1.bf16.msra.mxu0 0
      %464 = vmatprep.subr.bf16.mxu0 0
      %465 = vmatpush1.bf16.msra.mxu0 0
      %466 = vmatprep.subr.bf16.mxu0 0
      %467 = vmatpush1.bf16.msra.mxu0 0
      %468 = vmatprep.subr.bf16.mxu0 0
      %469 = vmatpush1.bf16.msra.mxu0 0
      %470 = vmatprep.subr.bf16.mxu0 0
      %471 = vmatpush1.bf16.msra.mxu0 0
      %472 = vmatprep.subr.bf16.mxu0 0
      %473 = vmatpush1.bf16.msra.mxu0 0
      %474 = vmatprep.subr.bf16.mxu0 0
      %475 = vmatpush1.bf16.msra.mxu0 0
      %476 = vmatprep.subr.bf16.mxu0 0
      %477 = vmatpush1.bf16.msra.mxu0 0
      %478 = vmatprep.subr.bf16.mxu0 0
      %479 = vmatpush1.bf16.msra.mxu0 0
      %480 = vmatprep.subr.bf16.mxu0 0
      %481 = vmatpush1.bf16.msra.mxu0 0
      %482 = vmatprep.subr.bf16.mxu0 0
      %483 = vmatpush1.bf16.msra.mxu0 0
      %484 = vmatprep.subr.bf16.mxu0 0
      %485 = vmatpush1.bf16.msra.mxu0 0
      %486 = vmatprep.subr.bf16.mxu0 0
      %487 = vmatpush1.bf16.msra.mxu0 0
      %488 = vmatprep.subr.bf16.mxu0 0
      %489 = vmatpush1.bf16.msra.mxu0 0
      %490 = vmatprep.subr.bf16.mxu0 0
      %491 = vmatpush1.bf16.msra.mxu0 0
      %492 = vmatprep.mubr.bf16.mxu0 0
      %493 = vmatmul.mubr.bf16.gmra.mrb[0].mxu0 %v436
      %v494 = vpop.f32.mrb[0].mxu0
      %v495 = vadd.f32 %v397, %v494
      %v496 = vpop.f32.mrb[0].mxu0
      %v497 = vadd.f32 %v397, %v496
      %v498 = vpop.f32.mrb[0].mxu0
      %v499 = vadd.f32 %v402, %v498
      %v500 = vpop.f32.mrb[0].mxu0
      %v501 = vadd.f32 %v402, %v500
      %502 = vmatprep.mubr.bf16.mxu0 0
      %503 = vmatmul.mubr.bf16.gmra.mrb[0].mxu0 %v439
      %v504 = vpop.f32.mrb[0].mxu0
      %v505 = vadd.f32 %v407, %v504
      %v506 = vpop.f32.mrb[0].mxu0
      %v507 = vadd.f32 %v407, %v506
      %v508 = vpop.f32.mrb[0].mxu0
      %v509 = vadd.f32 %v412, %v508
      %v510 = vpop.f32.mrb[0].mxu0
      %v511 = vadd.f32 %v412, %v510
      %512 = vmatprep.mubr.bf16.mxu0 0
      %513 = vmatmul.mubr.bf16.gmra.mrb[0].mxu0 %v442
      %v514 = vpop.f32.mrb[0].mxu0
      %v515 = vadd.f32 %v417, %v514
      %v516 = vpop.f32.mrb[0].mxu0
      %v517 = vadd.f32 %v417, %v516
      %v518 = vpop.f32.mrb[0].mxu0
      %v519 = vadd.f32 %v422, %v518
      %v520 = vpop.f32.mrb[0].mxu0
      %v521 = vadd.f32 %v422, %v520
      %522 = vmatprep.mubr.bf16.mxu0 0
      %523 = vmatmul.mubr.bf16.gmra.mrb[0].mxu0 %v445
      %v524 = vpop.f32.mrb[0].mxu0
      %v525 = vadd.f32 %v427, %v524
      %v526 = vpop.f32.mrb[0].mxu0
      %v527 = vadd.f32 %v427, %v526
      %v528 = vpop.f32.mrb[0].mxu0
      %v529 = vadd.f32 %v432, %v528
      %v530 = vpop.f32.mrb[0].mxu0
      %v531 = vadd.f32 %v432, %v530
      %532 = vdwg.mxu0
      %533 = vmatprep.subr.bf16.mxu0 %v458
      %534 = vmatpush1.bf16.msra.mxu0 %v455
      %535 = vmatprep.subr.bf16.mxu0 0
      %536 = vmatpush1.bf16.msra.mxu0 0
      %537 = vmatprep.subr.bf16.mxu0 0
      %538 = vmatpush1.bf16.msra.mxu0 0
      %539 = vmatprep.subr.bf16.mxu0 0
      %540 = vmatpush1.bf16.msra.mxu0 0
      %541 = vmatprep.subr.bf16.mxu0 0
      %542 = vmatpush1.bf16.msra.mxu0 0
      %543 = vmatprep.subr.bf16.mxu0 0
      %544 = vmatpush1.bf16.msra.mxu0 0
      %545 = vmatprep.subr.bf16.mxu0 0
      %546 = vmatpush1.bf16.msra.mxu0 0
      %547 = vmatprep.subr.bf16.mxu0 0
      %548 = vmatpush1.bf16.msra.mxu0 0
      %549 = vmatprep.subr.bf16.mxu0 0
      %550 = vmatpush1.bf16.msra.mxu0 0
      %551 = vmatprep.subr.bf16.mxu0 0
      %552 = vmatpush1.bf16.msra.mxu0 0
      %553 = vmatprep.subr.bf16.mxu0 0
      %554 = vmatpush1.bf16.msra.mxu0 0
      %555 = vmatprep.subr.bf16.mxu0 0
      %556 = vmatpush1.bf16.msra.mxu0 0
      %557 = vmatprep.subr.bf16.mxu0 0
      %558 = vmatpush1.bf16.msra.mxu0 0
      %559 = vmatprep.subr.bf16.mxu0 0
      %560 = vmatpush1.bf16.msra.mxu0 0
      %561 = vmatprep.subr.bf16.mxu0 0
      %562 = vmatpush1.bf16.msra.mxu0 0
      %563 = vmatprep.subr.bf16.mxu0 0
      %564 = vmatpush1.bf16.msra.mxu0 0
      %565 = vmatprep.mubr.bf16.mxu0 0
      %566 = vmatmul.mubr.bf16.gmra.mrb[0].mxu0 %v436
      %v567 = vpop.f32.mrb[0].mxu0
      %v568 = vadd.f32 %v397, %v567
      %v569 = vpop.f32.mrb[0].mxu0
      %v570 = vadd.f32 %v397, %v569
      %v571 = vpop.f32.mrb[0].mxu0
      %v572 = vadd.f32 %v402, %v571
      %v573 = vpop.f32.mrb[0].mxu0
      %v574 = vadd.f32 %v402, %v573
      %575 = vmatprep.mubr.bf16.mxu0 0
      %576 = vmatmul.mubr.bf16.gmra.mrb[0].mxu0 %v439
      %v577 = vpop.f32.mrb[0].mxu0
      %v578 = vadd.f32 %v407, %v577
      %v579 = vpop.f32.mrb[0].mxu0
      %v580 = vadd.f32 %v407, %v579
      %v581 = vpop.f32.mrb[0].mxu0
      %v582 = vadd.f32 %v412, %v581
      %v583 = vpop.f32.mrb[0].mxu0
      %v584 = vadd.f32 %v412, %v583
      %585 = vmatprep.mubr.bf16.mxu0 0
      %586 = vmatmul.mubr.bf16.gmra.mrb[0].mxu0 %v442
      %v587 = vpop.f32.mrb[0].mxu0
      %v588 = vadd.f32 %v417, %v587
      %v589 = vpop.f32.mrb[0].mxu0
      %v590 = vadd.f32 %v417, %v589
      %v591 = vpop.f32.mrb[0].mxu0
      %v592 = vadd.f32 %v422, %v591
      %v593 = vpop.f32.mrb[0].mxu0
      %v594 = vadd.f32 %v422, %v593
      %595 = vmatprep.mubr.bf16.mxu0 0
      %596 = vmatmul.mubr.bf16.gmra.mrb[0].mxu0 %v445
      %v597 = vpop.f32.mrb[0].mxu0
      %v598 = vadd.f32 %v427, %v597
      %v599 = vpop.f32.mrb[0].mxu0
      %v600 = vadd.f32 %v427, %v599
      %v601 = vpop.f32.mrb[0].mxu0
      %v602 = vadd.f32 %v432, %v601
      %v603 = vpop.f32.mrb[0].mxu0
      %v604 = vadd.f32 %v432, %v603
      %605 = vdwg.mxu0
      %v606 = vmul.f32 %v495, 0.2
      %v607 = vmul.f32 %v497, 0.2
      %v608 = vmul.f32 %v568, 0.2
      %v609 = vmul.f32 %v570, 0.2
      %v610 = vmul.f32 %v499, 0.2
      %v611 = vmul.f32 %v501, 0.2
      %v612 = vmul.f32 %v572, 0.2
      %v613 = vmul.f32 %v574, 0.2
      %v614 = vmul.f32 %v505, 0.2
      %v615 = vmul.f32 %v507, 0.2
      %v616 = vmul.f32 %v578, 0.2
      %v617 = vmul.f32 %v580, 0.2
      %v618 = vmul.f32 %v509, 0.2
      %v619 = vmul.f32 %v511, 0.2
      %v620 = vmul.f32 %v582, 0.2
      %v621 = vmul.f32 %v584, 0.2
      %v622 = vmul.f32 %v515, 0.2
      %v623 = vmul.f32 %v517, 0.2
      %v624 = vmul.f32 %v588, 0.2
      %v625 = vmul.f32 %v590, 0.2
      %v626 = vmul.f32 %v519, 0.2
      %v627 = vmul.f32 %v521, 0.2
      %v628 = vmul.f32 %v592, 0.2
      %v629 = vmul.f32 %v594, 0.2
      %v630 = vmul.f32 %v525, 0.2
      %v631 = vmul.f32 %v527, 0.2
      %v632 = vmul.f32 %v598, 0.2
      %v633 = vmul.f32 %v600, 0.2
      %v634 = vmul.f32 %v529, 0.2
      %v635 = vmul.f32 %v531, 0.2
      %v636 = vmul.f32 %v602, 0.2
      %v637 = vmul.f32 %v604, 0.2
      %v638 = vmax.f32 %v495, %v606
      %v639 = vmax.f32 %v497, %v607
      %v640 = vmax.f32 %v568, %v608
      %v641 = vmax.f32 %v570, %v609
      %v642 = vmax.f32 %v499, %v610
      %v643 = vmax.f32 %v501, %v611
      %v644 = vmax.f32 %v572, %v612
      %v645 = vmax.f32 %v574, %v613
      %v646 = vmax.f32 %v505, %v614
      %v647 = vmax.f32 %v507, %v615
      %v648 = vmax.f32 %v578, %v616
      %v649 = vmax.f32 %v580, %v617
      %v650 = vmax.f32 %v509, %v618
      %v651 = vmax.f32 %v511, %v619
      %v652 = vmax.f32 %v582, %v620
      %v653 = vmax.f32 %v584, %v621
      %v654 = vmax.f32 %v515, %v622
      %v655 = vmax.f32 %v517, %v623
      %v656 = vmax.f32 %v588, %v624
      %v657 = vmax.f32 %v590, %v625
      %v658 = vmax.f32 %v519, %v626
      %v659 = vmax.f32 %v521, %v627
      %v660 = vmax.f32 %v592, %v628
      %v661 = vmax.f32 %v594, %v629
      %v662 = vmax.f32 %v525, %v630
      %v663 = vmax.f32 %v527, %v631
      %v664 = vmax.f32 %v598, %v632
      %v665 = vmax.f32 %v600, %v633
      %v666 = vmax.f32 %v529, %v634
      %v667 = vmax.f32 %v531, %v635
      %v668 = vmax.f32 %v602, %v636
      %v669 = vmax.f32 %v604, %v637
      %v670 = vpack.c.bf16 %v642, %v638
      %v671 = vpack.c.bf16 %v643, %v639
      %v672 = vpack.c.bf16 %v644, %v640
      %v673 = vpack.c.bf16 %v645, %v641
      %v674 = vpack.c.bf16 %v650, %v646
      %v675 = vpack.c.bf16 %v651, %v647
      %v676 = vpack.c.bf16 %v652, %v648
      %v677 = vpack.c.bf16 %v653, %v649
      %v678 = vpack.c.bf16 %v658, %v654
      %v679 = vpack.c.bf16 %v659, %v655
      %v680 = vpack.c.bf16 %v660, %v656
      %v681 = vpack.c.bf16 %v661, %v657
      %v682 = vpack.c.bf16 %v666, %v662
      %v683 = vpack.c.bf16 %v667, %v663
      %v684 = vpack.c.bf16 %v668, %v664
      %v685 = vpack.c.bf16 %v669, %v665
      %vm686 = vcmask 523264
      %v688 = vsel %vm686, %v378, 0
      %v691 = vsel %vm686, %v379, 0
      %v694 = vsel %vm686, %v380, 0
      %v697 = vsel %vm686, %v381, 0
      %v700 = vsel %vm686, %v382, 0
      %v703 = vsel %vm686, %v383, 0
      %v706 = vsel %vm686, %v384, 0
      %v709 = vsel %vm686, %v385, 0
      %711 = vmatprep.subr.bf16.mxu0 %v671
      %712 = vmatpush1.bf16.msra.mxu0 %v670
      %713 = vmatprep.subr.bf16.mxu0 %v675
      %714 = vmatpush1.bf16.msra.mxu0 %v674
      %715 = vmatprep.subr.bf16.mxu0 %v679
      %716 = vmatpush1.bf16.msra.mxu0 %v678
      %717 = vmatprep.subr.bf16.mxu0 %v683
      %718 = vmatpush1.bf16.msra.mxu0 %v682
      %719 = vmatprep.subr.bf16.mxu0 0
      %720 = vmatpush1.bf16.msra.mxu0 0
      %721 = vmatprep.subr.bf16.mxu0 0
      %722 = vmatpush1.bf16.msra.mxu0 0
      %723 = vmatprep.subr.bf16.mxu0 0
      %724 = vmatpush1.bf16.msra.mxu0 0
      %725 = vmatprep.subr.bf16.mxu0 0
      %726 = vmatpush1.bf16.msra.mxu0 0
      %727 = vmatprep.subr.bf16.mxu0 0
      %728 = vmatpush1.bf16.msra.mxu0 0
      %729 = vmatprep.subr.bf16.mxu0 0
      %730 = vmatpush1.bf16.msra.mxu0 0
      %731 = vmatprep.subr.bf16.mxu0 0
      %732 = vmatpush1.bf16.msra.mxu0 0
      %733 = vmatprep.subr.bf16.mxu0 0
      %734 = vmatpush1.bf16.msra.mxu0 0
      %735 = vmatprep.subr.bf16.mxu0 0
      %736 = vmatpush1.bf16.msra.mxu0 0
      %737 = vmatprep.subr.bf16.mxu0 0
      %738 = vmatpush1.bf16.msra.mxu0 0
      %739 = vmatprep.subr.bf16.mxu0 0
      %740 = vmatpush1.bf16.msra.mxu0 0
      %741 = vmatprep.subr.bf16.mxu0 0
      %742 = vmatpush1.bf16.msra.mxu0 0
      %743 = vmatprep.mubr.bf16.mxu0 0
      %744 = vmatmul.mubr.bf16.gmra.mrb[0].mxu0 %v688
      %v745 = vpop.f32.mrb[0].mxu0
      %v746 = vadd.f32 0.0, %v745
      %v747 = vpop.f32.mrb[0].mxu0
      %v748 = vadd.f32 0.0, %v747
      %v749 = vpop.f32.mrb[0].mxu0
      %v750 = vadd.f32 0.0, %v749
      %v751 = vpop.f32.mrb[0].mxu0
      %v752 = vadd.f32 0.0, %v751
      %753 = vmatprep.mubr.bf16.mxu0 0
      %754 = vmatmul.mubr.bf16.gmra.mrb[0].mxu0 %v691
      %v755 = vpop.f32.mrb[0].mxu0
      %v756 = vadd.f32 0.0, %v755
      %v757 = vpop.f32.mrb[0].mxu0
      %v758 = vadd.f32 0.0, %v757
      %v759 = vpop.f32.mrb[0].mxu0
      %v760 = vadd.f32 0.0, %v759
      %v761 = vpop.f32.mrb[0].mxu0
      %v762 = vadd.f32 0.0, %v761
      %763 = vmatprep.mubr.bf16.mxu0 0
      %764 = vmatmul.mubr.bf16.gmra.mrb[0].mxu0 %v694
      %v765 = vpop.f32.mrb[0].mxu0
      %v766 = vadd.f32 0.0, %v765
      %v767 = vpop.f32.mrb[0].mxu0
      %v768 = vadd.f32 0.0, %v767
      %v769 = vpop.f32.mrb[0].mxu0
      %v770 = vadd.f32 0.0, %v769
      %v771 = vpop.f32.mrb[0].mxu0
      %v772 = vadd.f32 0.0, %v771
      %773 = vmatprep.mubr.bf16.mxu0 0
      %774 = vmatmul.mubr.bf16.gmra.mrb[0].mxu0 %v697
      %v775 = vpop.f32.mrb[0].mxu0
      %v776 = vadd.f32 0.0, %v775
      %v777 = vpop.f32.mrb[0].mxu0
      %v778 = vadd.f32 0.0, %v777
      %v779 = vpop.f32.mrb[0].mxu0
      %v780 = vadd.f32 0.0, %v779
      %v781 = vpop.f32.mrb[0].mxu0
      %v782 = vadd.f32 0.0, %v781
      %783 = vmatprep.mubr.bf16.mxu0 0
      %784 = vmatmul.mubr.bf16.gmra.mrb[0].mxu0 %v700
      %v785 = vpop.f32.mrb[0].mxu0
      %v786 = vadd.f32 0.0, %v785
      %v787 = vpop.f32.mrb[0].mxu0
      %v788 = vadd.f32 0.0, %v787
      %v789 = vpop.f32.mrb[0].mxu0
      %v790 = vadd.f32 0.0, %v789
      %v791 = vpop.f32.mrb[0].mxu0
      %v792 = vadd.f32 0.0, %v791
      %793 = vmatprep.mubr.bf16.mxu0 0
      %794 = vmatmul.mubr.bf16.gmra.mrb[0].mxu0 %v703
      %v795 = vpop.f32.mrb[0].mxu0
      %v796 = vadd.f32 0.0, %v795
      %v797 = vpop.f32.mrb[0].mxu0
      %v798 = vadd.f32 0.0, %v797
      %v799 = vpop.f32.mrb[0].mxu0
      %v800 = vadd.f32 0.0, %v799
      %v801 = vpop.f32.mrb[0].mxu0
      %v802 = vadd.f32 0.0, %v801
      %803 = vmatprep.mubr.bf16.mxu0 0
      %804 = vmatmul.mubr.bf16.gmra.mrb[0].mxu0 %v706
      %v805 = vpop.f32.mrb[0].mxu0
      %v806 = vadd.f32 0.0, %v805
      %v807 = vpop.f32.mrb[0].mxu0
      %v808 = vadd.f32 0.0, %v807
      %v809 = vpop.f32.mrb[0].mxu0
      %v810 = vadd.f32 0.0, %v809
      %v811 = vpop.f32.mrb[0].mxu0
      %v812 = vadd.f32 0.0, %v811
      %813 = vmatprep.mubr.bf16.mxu0 0
      %814 = vmatmul.mubr.bf16.gmra.mrb[0].mxu0 %v709
      %v815 = vpop.f32.mrb[0].mxu0
      %v816 = vadd.f32 0.0, %v815
      %v817 = vpop.f32.mrb[0].mxu0
      %v818 = vadd.f32 0.0, %v817
      %v819 = vpop.f32.mrb[0].mxu0
      %v820 = vadd.f32 0.0, %v819
      %v821 = vpop.f32.mrb[0].mxu0
      %v822 = vadd.f32 0.0, %v821
      %823 = vdwg.mxu0
      %824 = vmatprep.subr.bf16.mxu0 %v673
      %825 = vmatpush1.bf16.msra.mxu0 %v672
      %826 = vmatprep.subr.bf16.mxu0 %v677
      %827 = vmatpush1.bf16.msra.mxu0 %v676
      %828 = vmatprep.subr.bf16.mxu0 %v681
      %829 = vmatpush1.bf16.msra.mxu0 %v680
      %830 = vmatprep.subr.bf16.mxu0 %v685
      %831 = vmatpush1.bf16.msra.mxu0 %v684
      %832 = vmatprep.subr.bf16.mxu0 0
      %833 = vmatpush1.bf16.msra.mxu0 0
      %834 = vmatprep.subr.bf16.mxu0 0
      %835 = vmatpush1.bf16.msra.mxu0 0
      %836 = vmatprep.subr.bf16.mxu0 0
      %837 = vmatpush1.bf16.msra.mxu0 0
      %838 = vmatprep.subr.bf16.mxu0 0
      %839 = vmatpush1.bf16.msra.mxu0 0
      %840 = vmatprep.subr.bf16.mxu0 0
      %841 = vmatpush1.bf16.msra.mxu0 0
      %842 = vmatprep.subr.bf16.mxu0 0
      %843 = vmatpush1.bf16.msra.mxu0 0
      %844 = vmatprep.subr.bf16.mxu0 0
      %845 = vmatpush1.bf16.msra.mxu0 0
      %846 = vmatprep.subr.bf16.mxu0 0
      %847 = vmatpush1.bf16.msra.mxu0 0
      %848 = vmatprep.subr.bf16.mxu0 0
      %849 = vmatpush1.bf16.msra.mxu0 0
      %850 = vmatprep.subr.bf16.mxu0 0
      %851 = vmatpush1.bf16.msra.mxu0 0
      %852 = vmatprep.subr.bf16.mxu0 0
      %853 = vmatpush1.bf16.msra.mxu0 0
      %854 = vmatprep.subr.bf16.mxu0 0
      %855 = vmatpush1.bf16.msra.mxu0 0
      %856 = vmatprep.mubr.bf16.mxu0 0
      %857 = vmatmul.mubr.bf16.gmra.mrb[0].mxu0 %v688
      %v858 = vpop.f32.mrb[0].mxu0
      %v859 = vadd.f32 0.0, %v858
      %v860 = vpop.f32.mrb[0].mxu0
      %v861 = vadd.f32 0.0, %v860
      %v862 = vpop.f32.mrb[0].mxu0
      %v863 = vadd.f32 0.0, %v862
      %v864 = vpop.f32.mrb[0].mxu0
      %v865 = vadd.f32 0.0, %v864
      %866 = vmatprep.mubr.bf16.mxu0 0
      %867 = vmatmul.mubr.bf16.gmra.mrb[0].mxu0 %v691
      %v868 = vpop.f32.mrb[0].mxu0
      %v869 = vadd.f32 0.0, %v868
      %v870 = vpop.f32.mrb[0].mxu0
      %v871 = vadd.f32 0.0, %v870
      %v872 = vpop.f32.mrb[0].mxu0
      %v873 = vadd.f32 0.0, %v872
      %v874 = vpop.f32.mrb[0].mxu0
      %v875 = vadd.f32 0.0, %v874
      %876 = vmatprep.mubr.bf16.mxu0 0
      %877 = vmatmul.mubr.bf16.gmra.mrb[0].mxu0 %v694
      %v878 = vpop.f32.mrb[0].mxu0
      %v879 = vadd.f32 0.0, %v878
      %v880 = vpop.f32.mrb[0].mxu0
      %v881 = vadd.f32 0.0, %v880
      %v882 = vpop.f32.mrb[0].mxu0
      %v883 = vadd.f32 0.0, %v882
      %v884 = vpop.f32.mrb[0].mxu0
      %v885 = vadd.f32 0.0, %v884
      %886 = vmatprep.mubr.bf16.mxu0 0
      %887 = vmatmul.mubr.bf16.gmra.mrb[0].mxu0 %v697
      %v888 = vpop.f32.mrb[0].mxu0
      %v889 = vadd.f32 0.0, %v888
      %v890 = vpop.f32.mrb[0].mxu0
      %v891 = vadd.f32 0.0, %v890
      %v892 = vpop.f32.mrb[0].mxu0
      %v893 = vadd.f32 0.0, %v892
      %v894 = vpop.f32.mrb[0].mxu0
      %v895 = vadd.f32 0.0, %v894
      %896 = vmatprep.mubr.bf16.mxu0 0
      %897 = vmatmul.mubr.bf16.gmra.mrb[0].mxu0 %v700
      %v898 = vpop.f32.mrb[0].mxu0
      %v899 = vadd.f32 0.0, %v898
      %v900 = vpop.f32.mrb[0].mxu0
      %v901 = vadd.f32 0.0, %v900
      %v902 = vpop.f32.mrb[0].mxu0
      %v903 = vadd.f32 0.0, %v902
      %v904 = vpop.f32.mrb[0].mxu0
      %v905 = vadd.f32 0.0, %v904
      %906 = vmatprep.mubr.bf16.mxu0 0
      %907 = vmatmul.mubr.bf16.gmra.mrb[0].mxu0 %v703
      %v908 = vpop.f32.mrb[0].mxu0
      %v909 = vadd.f32 0.0, %v908
      %v910 = vpop.f32.mrb[0].mxu0
      %v911 = vadd.f32 0.0, %v910
      %v912 = vpop.f32.mrb[0].mxu0
      %v913 = vadd.f32 0.0, %v912
      %v914 = vpop.f32.mrb[0].mxu0
      %v915 = vadd.f32 0.0, %v914
      %916 = vmatprep.mubr.bf16.mxu0 0
      %917 = vmatmul.mubr.bf16.gmra.mrb[0].mxu0 %v706
      %v918 = vpop.f32.mrb[0].mxu0
      %v919 = vadd.f32 0.0, %v918
      %v920 = vpop.f32.mrb[0].mxu0
      %v921 = vadd.f32 0.0, %v920
      %v922 = vpop.f32.mrb[0].mxu0
      %v923 = vadd.f32 0.0, %v922
      %v924 = vpop.f32.mrb[0].mxu0
      %v925 = vadd.f32 0.0, %v924
      %926 = vmatprep.mubr.bf16.mxu0 0
      %927 = vmatmul.mubr.bf16.gmra.mrb[0].mxu0 %v709
      %v928 = vpop.f32.mrb[0].mxu0
      %v929 = vadd.f32 0.0, %v928
      %v930 = vpop.f32.mrb[0].mxu0
      %v931 = vadd.f32 0.0, %v930
      %v932 = vpop.f32.mrb[0].mxu0
      %v933 = vadd.f32 0.0, %v932
      %v934 = vpop.f32.mrb[0].mxu0
      %v935 = vadd.f32 0.0, %v934
      %936 = vdwg.mxu0
      %v937 = vld [vmem:[%s290] sm:$0xff]
      %v938 = vld [vmem:[%s290 + $0x8] sm:$0xff]
      %v939 = vld [vmem:[%s290 + $0x10] sm:$0xff]
      %v940 = vld [vmem:[%s290 + $0x18] sm:$0xff]
      %v941 = vld [vmem:[%s290 + $0x20] sm:$0xff]
      %v942 = vld [vmem:[%s290 + $0x28] sm:$0xff]
      %v943 = vld [vmem:[%s290 + $0x30] sm:$0xff]
      %v944 = vld [vmem:[%s290 + $0x38] sm:$0xff]
      %v945 = vld [vmem:[%s290 + $0x40] sm:$0xff]
      %v946 = vld [vmem:[%s290 + $0x48] sm:$0xff]
      %v947 = vld [vmem:[%s290 + $0x50] sm:$0xff]
      %v948 = vld [vmem:[%s290 + $0x58] sm:$0xff]
      %v949 = vld [vmem:[%s290 + $0x60] sm:$0xff]
      %v950 = vld [vmem:[%s290 + $0x68] sm:$0xff]
      %v951 = vld [vmem:[%s290 + $0x70] sm:$0xff]
      %v952 = vld [vmem:[%s290 + $0x78] sm:$0xff]
      %v953 = vadd.f32 %v746, %v748
      %v954 = vadd.f32 %v953, %v859
      %v955 = vadd.f32 %v954, %v861
      %956 = vadd.xlane.f32.xlu0 %v955
      %v957 = vpop.xlane.xlu0 %956
      %v958 = vadd.f32 %v750, %v752
      %v959 = vadd.f32 %v958, %v863
      %v960 = vadd.f32 %v959, %v865
      %961 = vadd.xlane.f32.xlu0 %v960
      %v962 = vpop.xlane.xlu0 %961
      %v963 = vadd.f32 %v756, %v758
      %v964 = vadd.f32 %v963, %v869
      %v965 = vadd.f32 %v964, %v871
      %966 = vadd.xlane.f32.xlu0 %v965
      %v967 = vpop.xlane.xlu0 %966
      %v968 = vadd.f32 %v760, %v762
      %v969 = vadd.f32 %v968, %v873
      %v970 = vadd.f32 %v969, %v875
      %971 = vadd.xlane.f32.xlu0 %v970
      %v972 = vpop.xlane.xlu0 %971
      %v973 = vadd.f32 %v766, %v768
      %v974 = vadd.f32 %v973, %v879
      %v975 = vadd.f32 %v974, %v881
      %976 = vadd.xlane.f32.xlu0 %v975
      %v977 = vpop.xlane.xlu0 %976
      %v978 = vadd.f32 %v770, %v772
      %v979 = vadd.f32 %v978, %v883
      %v980 = vadd.f32 %v979, %v885
      %981 = vadd.xlane.f32.xlu0 %v980
      %v982 = vpop.xlane.xlu0 %981
      %v983 = vadd.f32 %v776, %v778
      %v984 = vadd.f32 %v983, %v889
      %v985 = vadd.f32 %v984, %v891
      %986 = vadd.xlane.f32.xlu0 %v985
      %v987 = vpop.xlane.xlu0 %986
      %v988 = vadd.f32 %v780, %v782
      %v989 = vadd.f32 %v988, %v893
      %v990 = vadd.f32 %v989, %v895
      %991 = vadd.xlane.f32.xlu0 %v990
      %v992 = vpop.xlane.xlu0 %991
      %v993 = vadd.f32 %v786, %v788
      %v994 = vadd.f32 %v993, %v899
      %v995 = vadd.f32 %v994, %v901
      %996 = vadd.xlane.f32.xlu0 %v995
      %v997 = vpop.xlane.xlu0 %996
      %v998 = vadd.f32 %v790, %v792
      %v999 = vadd.f32 %v998, %v903
      %v1000 = vadd.f32 %v999, %v905
      %1001 = vadd.xlane.f32.xlu0 %v1000
      %v1002 = vpop.xlane.xlu0 %1001
      %v1003 = vadd.f32 %v796, %v798
      %v1004 = vadd.f32 %v1003, %v909
      %v1005 = vadd.f32 %v1004, %v911
      %1006 = vadd.xlane.f32.xlu0 %v1005
      %v1007 = vpop.xlane.xlu0 %1006
      %v1008 = vadd.f32 %v800, %v802
      %v1009 = vadd.f32 %v1008, %v913
      %v1010 = vadd.f32 %v1009, %v915
      %1011 = vadd.xlane.f32.xlu0 %v1010
      %v1012 = vpop.xlane.xlu0 %1011
      %v1013 = vadd.f32 %v806, %v808
      %v1014 = vadd.f32 %v1013, %v919
      %v1015 = vadd.f32 %v1014, %v921
      %1016 = vadd.xlane.f32.xlu0 %v1015
      %v1017 = vpop.xlane.xlu0 %1016
      %v1018 = vadd.f32 %v810, %v812
      %v1019 = vadd.f32 %v1018, %v923
      %v1020 = vadd.f32 %v1019, %v925
      %1021 = vadd.xlane.f32.xlu0 %v1020
      %v1022 = vpop.xlane.xlu0 %1021
      %v1023 = vadd.f32 %v816, %v818
      %v1024 = vadd.f32 %v1023, %v929
      %v1025 = vadd.f32 %v1024, %v931
      %1026 = vadd.xlane.f32.xlu0 %v1025
      %v1027 = vpop.xlane.xlu0 %1026
      %v1028 = vadd.f32 %v820, %v822
      %v1029 = vadd.f32 %v1028, %v933
      %v1030 = vadd.f32 %v1029, %v935
      %1031 = vadd.xlane.f32.xlu0 %v1030
      %v1032 = vpop.xlane.xlu0 %1031
      %v1033 = vadd.f32 %v937, %v957
      %v1034 = vadd.f32 %v938, %v962
      %v1035 = vadd.f32 %v939, %v967
      %v1036 = vadd.f32 %v940, %v972
      %v1037 = vadd.f32 %v941, %v977
      %v1038 = vadd.f32 %v942, %v982
      %v1039 = vadd.f32 %v943, %v987
      %v1040 = vadd.f32 %v944, %v992
      %v1041 = vadd.f32 %v945, %v997
      %v1042 = vadd.f32 %v946, %v1002
      %v1043 = vadd.f32 %v947, %v1007
      %v1044 = vadd.f32 %v948, %v1012
      %v1045 = vadd.f32 %v949, %v1017
      %v1046 = vadd.f32 %v950, %v1022
      %v1047 = vadd.f32 %v951, %v1027
      %v1048 = vadd.f32 %v952, %v1032
      %vm1049 = vcmask 7168
      %1050 = vst.msk [vmem:[%s290] sm:$0xff] %vm1049, %v1033
      %1051 = vst.msk [vmem:[%s290 + $0x8] sm:$0xff] %vm1049, %v1034
      %1052 = vst.msk [vmem:[%s290 + $0x10] sm:$0xff] %vm1049, %v1035
      %1053 = vst.msk [vmem:[%s290 + $0x18] sm:$0xff] %vm1049, %v1036
      %1054 = vst.msk [vmem:[%s290 + $0x20] sm:$0xff] %vm1049, %v1037
      %1055 = vst.msk [vmem:[%s290 + $0x28] sm:$0xff] %vm1049, %v1038
      %1056 = vst.msk [vmem:[%s290 + $0x30] sm:$0xff] %vm1049, %v1039
      %1057 = vst.msk [vmem:[%s290 + $0x38] sm:$0xff] %vm1049, %v1040
      %1058 = vst.msk [vmem:[%s290 + $0x40] sm:$0xff] %vm1049, %v1041
      %1059 = vst.msk [vmem:[%s290 + $0x48] sm:$0xff] %vm1049, %v1042
      %1060 = vst.msk [vmem:[%s290 + $0x50] sm:$0xff] %vm1049, %v1043
      %1061 = vst.msk [vmem:[%s290 + $0x58] sm:$0xff] %vm1049, %v1044
      %1062 = vst.msk [vmem:[%s290 + $0x60] sm:$0xff] %vm1049, %v1045
      %1063 = vst.msk [vmem:[%s290 + $0x68] sm:$0xff] %vm1049, %v1046
      %1064 = vst.msk [vmem:[%s290 + $0x70] sm:$0xff] %vm1049, %v1047
      %1065 = vst.msk [vmem:[%s290 + $0x78] sm:$0xff] %vm1049, %v1048
      %v1066 = vld [vmem:[%s299] sm:$0xff]
      %v1067 = vld [vmem:[%s299 + $0x8] sm:$0xff]
      %v1068 = vld [vmem:[%s299 + $0x10] sm:$0xff]
      %v1069 = vld [vmem:[%s299 + $0x18] sm:$0xff]
      %v1070 = vld [vmem:[%s299 + $0x20] sm:$0xff]
      %v1071 = vld [vmem:[%s299 + $0x28] sm:$0xff]
      %v1072 = vld [vmem:[%s299 + $0x30] sm:$0xff]
      %v1073 = vld [vmem:[%s299 + $0x38] sm:$0xff]
      %v1074 = vld [vmem:[%s299 + $0x40] sm:$0xff]
      %v1075 = vld [vmem:[%s299 + $0x48] sm:$0xff]
      %v1076 = vld [vmem:[%s299 + $0x50] sm:$0xff]
      %v1077 = vld [vmem:[%s299 + $0x58] sm:$0xff]
      %v1078 = vld [vmem:[%s299 + $0x60] sm:$0xff]
      %v1079 = vld [vmem:[%s299 + $0x68] sm:$0xff]
      %v1080 = vld [vmem:[%s299 + $0x70] sm:$0xff]
      %v1081 = vld [vmem:[%s299 + $0x78] sm:$0xff]
      %v1082 = vmul.f32 %v746, %v746
      %v1083 = vmul.f32 %v748, %v748
      %v1084 = vmul.f32 %v859, %v859
      %v1085 = vmul.f32 %v861, %v861
      %v1086 = vmul.f32 %v750, %v750
      %v1087 = vmul.f32 %v752, %v752
      %v1088 = vmul.f32 %v863, %v863
      %v1089 = vmul.f32 %v865, %v865
      %v1090 = vmul.f32 %v756, %v756
      %v1091 = vmul.f32 %v758, %v758
      %v1092 = vmul.f32 %v869, %v869
      %v1093 = vmul.f32 %v871, %v871
      %v1094 = vmul.f32 %v760, %v760
      %v1095 = vmul.f32 %v762, %v762
      %v1096 = vmul.f32 %v873, %v873
      %v1097 = vmul.f32 %v875, %v875
      %v1098 = vmul.f32 %v766, %v766
      %v1099 = vmul.f32 %v768, %v768
      %v1100 = vmul.f32 %v879, %v879
      %v1101 = vmul.f32 %v881, %v881
      %v1102 = vmul.f32 %v770, %v770
      %v1103 = vmul.f32 %v772, %v772
      %v1104 = vmul.f32 %v883, %v883
      %v1105 = vmul.f32 %v885, %v885
      %v1106 = vmul.f32 %v776, %v776
      %v1107 = vmul.f32 %v778, %v778
      %v1108 = vmul.f32 %v889, %v889
      %v1109 = vmul.f32 %v891, %v891
      %v1110 = vmul.f32 %v780, %v780
      %v1111 = vmul.f32 %v782, %v782
      %v1112 = vmul.f32 %v893, %v893
      %v1113 = vmul.f32 %v895, %v895
      %v1114 = vmul.f32 %v786, %v786
      %v1115 = vmul.f32 %v788, %v788
      %v1116 = vmul.f32 %v899, %v899
      %v1117 = vmul.f32 %v901, %v901
      %v1118 = vmul.f32 %v790, %v790
      %v1119 = vmul.f32 %v792, %v792
      %v1120 = vmul.f32 %v903, %v903
      %v1121 = vmul.f32 %v905, %v905
      %v1122 = vmul.f32 %v796, %v796
      %v1123 = vmul.f32 %v798, %v798
      %v1124 = vmul.f32 %v909, %v909
      %v1125 = vmul.f32 %v911, %v911
      %v1126 = vmul.f32 %v800, %v800
      %v1127 = vmul.f32 %v802, %v802
      %v1128 = vmul.f32 %v913, %v913
      %v1129 = vmul.f32 %v915, %v915
      %v1130 = vmul.f32 %v806, %v806
      %v1131 = vmul.f32 %v808, %v808
      %v1132 = vmul.f32 %v919, %v919
      %v1133 = vmul.f32 %v921, %v921
      %v1134 = vmul.f32 %v810, %v810
      %v1135 = vmul.f32 %v812, %v812
      %v1136 = vmul.f32 %v923, %v923
      %v1137 = vmul.f32 %v925, %v925
      %v1138 = vmul.f32 %v816, %v816
      %v1139 = vmul.f32 %v818, %v818
      %v1140 = vmul.f32 %v929, %v929
      %v1141 = vmul.f32 %v931, %v931
      %v1142 = vmul.f32 %v820, %v820
      %v1143 = vmul.f32 %v822, %v822
      %v1144 = vmul.f32 %v933, %v933
      %v1145 = vmul.f32 %v935, %v935
      %v1146 = vadd.f32 %v1082, %v1083
      %v1147 = vadd.f32 %v1146, %v1084
      %v1148 = vadd.f32 %v1147, %v1085
      %1149 = vadd.xlane.f32.xlu0 %v1148
      %v1150 = vpop.xlane.xlu0 %1149
      %v1151 = vadd.f32 %v1086, %v1087
      %v1152 = vadd.f32 %v1151, %v1088
      %v1153 = vadd.f32 %v1152, %v1089
      %1154 = vadd.xlane.f32.xlu0 %v1153
      %v1155 = vpop.xlane.xlu0 %1154
      %v1156 = vadd.f32 %v1090, %v1091
      %v1157 = vadd.f32 %v1156, %v1092
      %v1158 = vadd.f32 %v1157, %v1093
      %1159 = vadd.xlane.f32.xlu0 %v1158
      %v1160 = vpop.xlane.xlu0 %1159
      %v1161 = vadd.f32 %v1094, %v1095
      %v1162 = vadd.f32 %v1161, %v1096
      %v1163 = vadd.f32 %v1162, %v1097
      %1164 = vadd.xlane.f32.xlu0 %v1163
      %v1165 = vpop.xlane.xlu0 %1164
      %v1166 = vadd.f32 %v1098, %v1099
      %v1167 = vadd.f32 %v1166, %v1100
      %v1168 = vadd.f32 %v1167, %v1101
      %1169 = vadd.xlane.f32.xlu0 %v1168
      %v1170 = vpop.xlane.xlu0 %1169
      %v1171 = vadd.f32 %v1102, %v1103
      %v1172 = vadd.f32 %v1171, %v1104
      %v1173 = vadd.f32 %v1172, %v1105
      %1174 = vadd.xlane.f32.xlu0 %v1173
      %v1175 = vpop.xlane.xlu0 %1174
      %v1176 = vadd.f32 %v1106, %v1107
      %v1177 = vadd.f32 %v1176, %v1108
      %v1178 = vadd.f32 %v1177, %v1109
      %1179 = vadd.xlane.f32.xlu0 %v1178
      %v1180 = vpop.xlane.xlu0 %1179
      %v1181 = vadd.f32 %v1110, %v1111
      %v1182 = vadd.f32 %v1181, %v1112
      %v1183 = vadd.f32 %v1182, %v1113
      %1184 = vadd.xlane.f32.xlu0 %v1183
      %v1185 = vpop.xlane.xlu0 %1184
      %v1186 = vadd.f32 %v1114, %v1115
      %v1187 = vadd.f32 %v1186, %v1116
      %v1188 = vadd.f32 %v1187, %v1117
      %1189 = vadd.xlane.f32.xlu0 %v1188
      %v1190 = vpop.xlane.xlu0 %1189
      %v1191 = vadd.f32 %v1118, %v1119
      %v1192 = vadd.f32 %v1191, %v1120
      %v1193 = vadd.f32 %v1192, %v1121
      %1194 = vadd.xlane.f32.xlu0 %v1193
      %v1195 = vpop.xlane.xlu0 %1194
      %v1196 = vadd.f32 %v1122, %v1123
      %v1197 = vadd.f32 %v1196, %v1124
      %v1198 = vadd.f32 %v1197, %v1125
      %1199 = vadd.xlane.f32.xlu0 %v1198
      %v1200 = vpop.xlane.xlu0 %1199
      %v1201 = vadd.f32 %v1126, %v1127
      %v1202 = vadd.f32 %v1201, %v1128
      %v1203 = vadd.f32 %v1202, %v1129
      %1204 = vadd.xlane.f32.xlu0 %v1203
      %v1205 = vpop.xlane.xlu0 %1204
      %v1206 = vadd.f32 %v1130, %v1131
      %v1207 = vadd.f32 %v1206, %v1132
      %v1208 = vadd.f32 %v1207, %v1133
      %1209 = vadd.xlane.f32.xlu0 %v1208
      %v1210 = vpop.xlane.xlu0 %1209
      %v1211 = vadd.f32 %v1134, %v1135
      %v1212 = vadd.f32 %v1211, %v1136
      %v1213 = vadd.f32 %v1212, %v1137
      %1214 = vadd.xlane.f32.xlu0 %v1213
      %v1215 = vpop.xlane.xlu0 %1214
      %v1216 = vadd.f32 %v1138, %v1139
      %v1217 = vadd.f32 %v1216, %v1140
      %v1218 = vadd.f32 %v1217, %v1141
      %1219 = vadd.xlane.f32.xlu0 %v1218
      %v1220 = vpop.xlane.xlu0 %1219
      %v1221 = vadd.f32 %v1142, %v1143
      %v1222 = vadd.f32 %v1221, %v1144
      %v1223 = vadd.f32 %v1222, %v1145
      %1224 = vadd.xlane.f32.xlu0 %v1223
      %v1225 = vpop.xlane.xlu0 %1224
      %v1226 = vadd.f32 %v1066, %v1150
      %v1227 = vadd.f32 %v1067, %v1155
      %v1228 = vadd.f32 %v1068, %v1160
      %v1229 = vadd.f32 %v1069, %v1165
      %v1230 = vadd.f32 %v1070, %v1170
      %v1231 = vadd.f32 %v1071, %v1175
      %v1232 = vadd.f32 %v1072, %v1180
      %v1233 = vadd.f32 %v1073, %v1185
      %v1234 = vadd.f32 %v1074, %v1190
      %v1235 = vadd.f32 %v1075, %v1195
      %v1236 = vadd.f32 %v1076, %v1200
      %v1237 = vadd.f32 %v1077, %v1205
      %v1238 = vadd.f32 %v1078, %v1210
      %v1239 = vadd.f32 %v1079, %v1215
      %v1240 = vadd.f32 %v1080, %v1220
      %v1241 = vadd.f32 %v1081, %v1225
      %1242 = vst.msk [vmem:[%s299] sm:$0xff] %vm1049, %v1226
      %1243 = vst.msk [vmem:[%s299 + $0x8] sm:$0xff] %vm1049, %v1227
      %1244 = vst.msk [vmem:[%s299 + $0x10] sm:$0xff] %vm1049, %v1228
      %1245 = vst.msk [vmem:[%s299 + $0x18] sm:$0xff] %vm1049, %v1229
      %1246 = vst.msk [vmem:[%s299 + $0x20] sm:$0xff] %vm1049, %v1230
      %1247 = vst.msk [vmem:[%s299 + $0x28] sm:$0xff] %vm1049, %v1231
      %1248 = vst.msk [vmem:[%s299 + $0x30] sm:$0xff] %vm1049, %v1232
      %1249 = vst.msk [vmem:[%s299 + $0x38] sm:$0xff] %vm1049, %v1233
      %1250 = vst.msk [vmem:[%s299 + $0x40] sm:$0xff] %vm1049, %v1234
      %1251 = vst.msk [vmem:[%s299 + $0x48] sm:$0xff] %vm1049, %v1235
      %1252 = vst.msk [vmem:[%s299 + $0x50] sm:$0xff] %vm1049, %v1236
      %1253 = vst.msk [vmem:[%s299 + $0x58] sm:$0xff] %vm1049, %v1237
      %1254 = vst.msk [vmem:[%s299 + $0x60] sm:$0xff] %vm1049, %v1238
      %1255 = vst.msk [vmem:[%s299 + $0x68] sm:$0xff] %vm1049, %v1239
      %1256 = vst.msk [vmem:[%s299 + $0x70] sm:$0xff] %vm1049, %v1240
      %1257 = vst.msk [vmem:[%s299 + $0x78] sm:$0xff] %vm1049, %v1241
      %p1258 = scmp.lt.s32.totalorder %s22, 0
      %s1259 = scalar_select %p1258, %s22, 0
      %p1260 = scmp.lt.s32.totalorder %s23, 1
      %s1261 = scalar_select %p1260, %s23, 1
      %s1262 = smul.addr %s1261, 16
      %s1263 = smul.addr %s1259, 32
      %s1264 = sadd.s32 %s1262, %s1263
      %s1265 = smul.addr %s1264, 8
      %s1266 = scalar_lea.vmem %s4, %s1265
      %p1267 = scmp.lt.s32.totalorder %s22, 0
      %s1268 = scalar_select %p1267, %s22, 0
      %p1269 = scmp.lt.s32.totalorder %s23, 1
      %s1270 = scalar_select %p1269, %s23, 1
      %s1271 = smul.addr %s1270, 16
      %s1272 = smul.addr %s1268, 32
      %s1273 = sadd.s32 %s1271, %s1272
      %s1274 = smul.addr %s1273, 8
      %s1275 = scalar_lea.vmem %s5, %s1274
      // Predicated region
      $region41: #{tpu_custom_call.1} parent=35 // pred_check
        %p1276 = pneg %p149
      $region42: #{tpu_custom_call.1} parent=35 // pred_check_branch
        %1278 = sbr.rel (%p1276) target = $region44
      $region43: #{tpu_custom_call.1} parent=35 // pred_region
        _
      $region44: #{tpu_custom_call.1} parent=35 // pred_fallthru
        _
      // Predicated region
      $region45: #{tpu_custom_call.1} parent=35 // pred_check
        %p1279 = pneg %p177
      $region46: #{tpu_custom_call.1} parent=35 // pred_check_branch
        %1281 = sbr.rel (%p1279) target = $region48
      $region47: #{tpu_custom_call.1} parent=35 // pred_region
        _
      $region48: #{tpu_custom_call.1} parent=35 // pred_fallthru
        _
    $region36: #{tpu_custom_call.1} parent=5 // pred_fallthru
      _
    %p1282 = scmp.le.s32.totalorder 2, %s12
    // Predicated region
    $region49: #{tpu_custom_call.1} parent=5 // pred_check
      %p1283 = pneg %p1282
    $region50: #{tpu_custom_call.1} parent=5 // pred_check_branch
      %1285 = sbr.rel (%p1283) target = $region52
    $region51: #{tpu_custom_call.1} parent=5 // pred_region
      %s1286 = ssub.s32 %s12, 2
      // Predicated region
      $region53: #{tpu_custom_call.1} parent=51 // pred_check
        %p1287 = pneg %p155
      $region54: #{tpu_custom_call.1} parent=51 // pred_check_branch
        %1289 = sbr.rel (%p1287) target = $region56
      $region55: #{tpu_custom_call.1} parent=51 // pred_region
        %p1290 = scmp.lt.s32.totalorder %s25, 0
        %s1291 = scalar_select %p1290, %s25, 0
        %p1292 = scmp.lt.s32.totalorder %s26, 1
        %s1293 = scalar_select %p1292, %s26, 1
        %s1294 = smul.addr %s1293, 16
        %s1295 = smul.addr %s1291, 32
        %s1296 = sadd.s32 %s1294, %s1295
        %s1297 = smul.addr %s1296, 8
        %s1298 = scalar_lea.vmem %s4, %s1297
      $region56: #{tpu_custom_call.1} parent=51 // pred_fallthru
        _
      // Predicated region
      $region57: #{tpu_custom_call.1} parent=51 // pred_check
        %p1299 = pneg %p183
      $region58: #{tpu_custom_call.1} parent=51 // pred_check_branch
        %1301 = sbr.rel (%p1299) target = $region60
      $region59: #{tpu_custom_call.1} parent=51 // pred_region
        %p1302 = scmp.lt.s32.totalorder %s25, 0
        %s1303 = scalar_select %p1302, %s25, 0
        %p1304 = scmp.lt.s32.totalorder %s26, 1
        %s1305 = scalar_select %p1304, %s26, 1
        %s1306 = smul.addr %s1305, 16
        %s1307 = smul.addr %s1303, 32
        %s1308 = sadd.s32 %s1306, %s1307
        %s1309 = smul.addr %s1308, 8
        %s1310 = scalar_lea.vmem %s5, %s1309
      $region60: #{tpu_custom_call.1} parent=51 // pred_fallthru
        _
    $region52: #{tpu_custom_call.1} parent=5 // pred_fallthru
      _
  $region6: #{tpu_custom_call.1} parent=0 // loop_footer
    %s16 = sadd.s32 1, %s12
  $region7: #{tpu_custom_call.1} parent=0 // loop_footer_branch
    %11 = sbr.rel target = $region3
  $region8: #{tpu_custom_call.1} parent=0 // loop_exit
    _

</llo_original>
